<compile_context>
chip_gen: v7x
topology: tpu7x:2x2x1
jax: 0.10.0
libtpu: 0.0.40
codegen_flags: <defaults>
</compile_context>

<pallas_src>
import math

import jax
import jax.numpy as jnp
from jax import lax
from jax.experimental import pallas as pl
from jax.experimental.pallas import tpu as pltpu


# ----------------------------- config (small, consistent with the module) ----
class Cfg:
    d_model = 64
    d_kv = 16
    n_heads = 4
    rel_attn_num_buckets = 32
    rel_attn_max_distance = 128
    dropout_rate = 0.1  # inference mode -> dropout is identity


INNER_DIM = Cfg.n_heads * Cfg.d_kv   # 64


# ----------------------------- T5 relative-position bias (glue, plain JAX) ---
def relative_position_bucket(relative_position, *, num_buckets, max_distance, bidirectional):
    relative_buckets = jnp.zeros_like(relative_position)
    if bidirectional:
        num_buckets //= 2
        relative_buckets = relative_buckets + jnp.where(relative_position > 0, num_buckets, 0)
        relative_position = jnp.abs(relative_position)
    else:
        relative_position = -jnp.minimum(relative_position, 0)
    num_exact = num_buckets // 2
    num_log = num_buckets - num_exact
    # Clamp to >= 1 inside the log: the log-spaced branch is only selected when
    # relative_position >= num_exact, so this only avoids -inf -> int32 conversion UB.
    safe_rel = jnp.maximum(relative_position, 1).astype(jnp.float32)
    log_ratio = jnp.log(safe_rel / num_exact) / math.log(max_distance / num_exact)
    log_pos = num_exact + (log_ratio * num_log).astype(jnp.int32)
    log_pos = jnp.minimum(log_pos, num_buckets - 1)
    is_exact = relative_position < num_exact
    relative_buckets = relative_buckets + jnp.where(is_exact, relative_position, log_pos)
    return relative_buckets


def compute_bias(rel_bias_weight, query_length, key_length, *, is_decoder):
    q_pos = jnp.arange(query_length, dtype=jnp.int32)[:, None]
    k_pos = jnp.arange(key_length, dtype=jnp.int32)[None, :]
    rel_pos = k_pos - q_pos
    buckets = relative_position_bucket(
        rel_pos,
        num_buckets=Cfg.rel_attn_num_buckets,
        max_distance=Cfg.rel_attn_max_distance,
        bidirectional=not is_decoder,
    )
    values = rel_bias_weight[buckets]                 # (Lq, Lk, H)
    values = jnp.transpose(values, (2, 0, 1))[None]   # (1, H, Lq, Lk)
    return values


# ----------------------------- Pallas kernel ---------------------------------
def attention_kernel(x_ref, enc_ref, wq_ref, wk_ref, wv_ref, wo_ref,
                     bias_ref, mask_ref, out_ref):
    """Single invocation: all heads and all batch elements.

    x_ref:    (B*Lq, d_model)   bf16  query-side tokens, batch-flattened
    enc_ref:  (B*Lk, d_model)   bf16  key/value-side tokens, batch-flattened
    wq/wk/wv: (d_model, inner)  bf16  fused projection weights (y = x @ W)
    wo_ref:   (inner, d_model)  bf16  output projection weight
    bias_ref: (H, Lq, Lk)       f32   relative-position bias
    mask_ref: (B, Lq, Lk)       f32   additive attention mask (head-independent)
    out_ref:  (B*Lq, d_model)   f32   attention output
    """
    B, Lq, Lk = mask_ref.shape
    H = bias_ref.shape[0]
    dkv = wq_ref.shape[1] // H

    x = x_ref[...]
    enc = enc_ref[...]

    # Fused Q/K/V projections: one full-width (64-lane) bf16 MXU matmul each instead of
    # H separate N=16 dots.  f32 accumulation, bf16 activations for the later MXU ops.
    q_all = jnp.dot(x, wq_ref[...], preferred_element_type=jnp.float32).astype(jnp.bfloat16)
    k_all = jnp.dot(enc, wk_ref[...], preferred_element_type=jnp.float32).astype(jnp.bfloat16)
    v_all = jnp.dot(enc, wv_ref[...], preferred_element_type=jnp.float32).astype(jnp.bfloat16)

    # Contract the feature dim of q and k directly (q @ k.T without materializing k.T).
    qk_dims = (((1,), (1,)), ((), ()))

    # TODO(synk): at H=4, B=2 a static unroll is fine; if H/B/L grow, batch these tiny
    # dots over a fused (H*B) axis (or lax.fori_loop + VMEM scratch accumulator) and use
    # an Lk-tiled online-softmax so bias/scores never materialize at full (Lq, Lk).
    pv_rows = []                                        # per-batch (Lq, inner) slabs
    for b in range(B):
        pv_heads = []
        for h in range(H):
            qh = q_all[b * Lq:(b + 1) * Lq, h * dkv:(h + 1) * dkv]   # (Lq, dkv) bf16
            kh = k_all[b * Lk:(b + 1) * Lk, h * dkv:(h + 1) * dkv]   # (Lk, dkv) bf16
            vh = v_all[b * Lk:(b + 1) * Lk, h * dkv:(h + 1) * dkv]   # (Lk, dkv) bf16

            # T5-style attention: no 1/sqrt(d_kv) scaling.
            scores = lax.dot_general(qh, kh, qk_dims,
                                     preferred_element_type=jnp.float32)  # (Lq, Lk) f32
            scores = scores + bias_ref[h] + mask_ref[b]

            # Softmax stays f32 with exact normalization (v5e VPU/EUP have no bf16).
            scores = scores - jnp.max(scores, axis=-1, keepdims=True)
            p = jnp.exp(scores)
            p = p / jnp.sum(p, axis=-1, keepdims=True)
            # TODO(synk): attention-weight dropout omitted (inference / training=False).

            pv_heads.append(jnp.dot(p.astype(jnp.bfloat16), vh,
                                    preferred_element_type=jnp.float32))  # (Lq, dkv) f32

        pv_rows.append(jnp.concatenate(pv_heads, axis=-1))                # (Lq, inner) f32

    # Heads back onto the lane axis, batches on the sublane axis -> one fused W_o matmul
    # and a single contiguous (B*Lq, d_model) store (lane-densest layout at d_model=64).
    pv_all = jnp.concatenate(pv_rows, axis=0).astype(jnp.bfloat16)        # (B*Lq, inner)
    out = jnp.dot(pv_all, wo_ref[...], preferred_element_type=jnp.float32)
    out_ref[...] = out.astype(out_ref.dtype)


# ----------------------------- wrapper ---------------------------------------
def attention_forward(hidden_states, mask, params, *, encoder_states=None,
                      position_bias=None, has_rel_pos_bias=True, is_decoder=False):
    """Mirrors Attention.forward; returns (attn_output, position_bias).

    Notes:
      * Linear weights are stored pre-transposed as (in_features, out_features).
      * The additive mask is assumed head-independent ((B,1,1,Lk) or (B,1,Lq,Lk)); a
        per-head mask would have to be folded into position_bias instead.
      * T5 semantics: no 1/sqrt(d_kv) scaling; dropout is identity (inference).
      * Matmuls use bf16 MXU inputs with f32 accumulation; softmax stays f32.
    """
    B, Lq, d_model = hidden_states.shape
    enc = hidden_states if encoder_states is None else encoder_states
    Lk = enc.shape[1]
    H = Cfg.n_heads

    if position_bias is None:
        if has_rel_pos_bias:
            position_bias = compute_bias(params["rel_bias"], Lq, Lk, is_decoder=is_decoder)
        else:
            position_bias = jnp.zeros((1, H, Lq, Lk), dtype=jnp.float32)

    bias_k = jnp.broadcast_to(position_bias, (1, H, Lq, Lk))[0].astype(jnp.float32)  # (H,Lq,Lk)
    mask_k = jnp.broadcast_to(mask, (B, 1, Lq, Lk))[:, 0].astype(jnp.float32)        # (B,Lq,Lk)

    # Batch fused onto the sublane axis; bf16 activations/weights halve DMA bytes and are
    # the MXU's native input type.  (In a real model the weight casts happen once at
    # parameter setup, not per call.)
    x_flat = hidden_states.reshape(B * Lq, d_model).astype(jnp.bfloat16)
    enc_flat = enc.reshape(B * Lk, d_model).astype(jnp.bfloat16)
    wq = params["wq"].astype(jnp.bfloat16)
    wk = params["wk"].astype(jnp.bfloat16)
    wv = params["wv"].astype(jnp.bfloat16)
    wo = params["wo"].astype(jnp.bfloat16)

    # Single kernel invocation (no grid): at these shapes a grid split only adds per-step
    # overhead (plus, for a head split, an extra XLA partial-sum kernel).  To use both
    # v7x TensorCores at larger L, re-introduce a grid over batch / Lq row blocks so the
    # output blocks stay disjoint and no cross-step reduction is needed.
    vmem = pl.BlockSpec(memory_space=pltpu.MemorySpace.VMEM)
    out = pl.pallas_call(
        attention_kernel,
        out_shape=jax.ShapeDtypeStruct((B * Lq, d_model), jnp.float32),
        in_specs=[vmem] * 8,
        out_specs=vmem,
    )(x_flat, enc_flat, wq, wk, wv, wo, bias_k, mask_k)

    attn_output = out.reshape(B, Lq, d_model).astype(hidden_states.dtype)
    return attn_output, position_bias


# ----------------------------- pure-JAX references for verification ----------
def attention_reference(hidden_states, mask, params, position_bias, *, matmul_dtype):
    """matmul_dtype=bfloat16 reproduces the kernel's MXU-input precision (up to
    accumulation order); matmul_dtype=float32 (HIGHEST precision) is the exact f32
    numerics of the PyTorch module."""
    B, L, _ = hidden_states.shape
    H, dkv = Cfg.n_heads, Cfg.d_kv
    prec = lax.Precision.HIGHEST if matmul_dtype == jnp.float32 else None

    x = hidden_states.astype(matmul_dtype)
    wq, wk, wv, wo = (params[n].astype(matmul_dtype) for n in ("wq", "wk", "wv", "wo"))

    def proj(w):
        y = jnp.dot(x, w, precision=prec, preferred_element_type=jnp.float32)
        return y.astype(matmul_dtype).reshape(B, L, H, dkv).transpose(0, 2, 1, 3)

    q, k, v = proj(wq), proj(wk), proj(wv)
    scores = jnp.einsum("bhqd,bhkd->bhqk", q, k, precision=prec,
                        preferred_element_type=jnp.float32)
    scores = scores + mask + position_bias
    scores = scores - jnp.max(scores, axis=-1, keepdims=True)
    p = jnp.exp(scores)
    p = p / jnp.sum(p, axis=-1, keepdims=True)
    pv = jnp.einsum("bhqk,bhkd->bhqd", p.astype(matmul_dtype), v, precision=prec,
                    preferred_element_type=jnp.float32)
    pv = pv.transpose(0, 2, 1, 3).reshape(B, L, H * dkv).astype(matmul_dtype)
    return jnp.dot(pv, wo, precision=prec, preferred_element_type=jnp.float32)


# ----------------------------- main -------------------------------------------
if __name__ == "__main__":
    B, L = 2, 16
    key = jax.random.PRNGKey(0)
    k_x, k_q, k_k, k_v, k_o, k_rb = jax.random.split(key, 6)

    hidden_states = jax.random.normal(k_x, (B, L, Cfg.d_model), dtype=jnp.float32)

    # Deterministic synthetic parameters (nn.Linear weights pre-transposed to (in, out)).
    scale = 1.0 / math.sqrt(Cfg.d_model)
    params = {
        "wq": jax.random.normal(k_q, (Cfg.d_model, INNER_DIM), dtype=jnp.float32) * scale,
        "wk": jax.random.normal(k_k, (Cfg.d_model, INNER_DIM), dtype=jnp.float32) * scale,
        "wv": jax.random.normal(k_v, (Cfg.d_model, INNER_DIM), dtype=jnp.float32) * scale,
        "wo": jax.random.normal(k_o, (INNER_DIM, Cfg.d_model), dtype=jnp.float32) * scale,
        "rel_bias": jax.random.normal(
            k_rb, (Cfg.rel_attn_num_buckets, Cfg.n_heads), dtype=jnp.float32) * 0.1,
    }

    # HF/T5-style additive mask: 0 for valid keys, -1e9 for masked keys.
    mask = jnp.zeros((B, 1, 1, L), dtype=jnp.float32)
    mask = mask.at[1, 0, 0, -2:].set(-1e9)   # mask last 2 key positions of batch 1

    out, pos_bias = attention_forward(hidden_states, mask, params,
                                      has_rel_pos_bias=True, is_decoder=False)
    out = jax.block_until_ready(out)
    assert out.shape == (B, L, Cfg.d_model)

    # Primary correctness gate: identical formula at the kernel's bf16 MXU-input precision.
    ref_match = attention_reference(hidden_states, mask, params, pos_bias,
                                    matmul_dtype=jnp.bfloat16)
    err = float(jnp.max(jnp.abs(out - ref_match)))
    assert jnp.allclose(out, ref_match, atol=2e-3, rtol=2e-3), (
        f"mismatch vs matched-precision reference (max abs err {err:.3e})")

    # Sanity check vs the exact f32 (HIGHEST-precision) module numerics; the slack covers
    # only the intentional bf16 MXU-input quantization.
    ref_f32 = attention_reference(hidden_states, mask, params, pos_bias,
                                  matmul_dtype=jnp.float32)
    err32 = float(jnp.max(jnp.abs(out - ref_f32)))
    assert jnp.allclose(out, ref_f32, atol=3e-1, rtol=1e-1), (
        f"mismatch vs f32 reference (max abs err {err32:.3e})")

    print("KERNEL_OK")
</pallas_src>

<mosaic_0001>
module attributes {stable_mosaic.version = 11 : i64} {
  func.func @attention_kernel(%arg0: memref<32x64xbf16, #tpu.memory_space<vmem>>, %arg1: memref<32x64xbf16, #tpu.memory_space<vmem>>, %arg2: memref<64x64xbf16, #tpu.memory_space<vmem>>, %arg3: memref<64x64xbf16, #tpu.memory_space<vmem>>, %arg4: memref<64x64xbf16, #tpu.memory_space<vmem>>, %arg5: memref<64x64xbf16, #tpu.memory_space<vmem>>, %arg6: memref<4x16x16xf32, #tpu.memory_space<vmem>>, %arg7: memref<2x16x16xf32, #tpu.memory_space<vmem>>, %arg8: memref<32x64xf32, #tpu.memory_space<vmem>>) attributes {dimension_semantics = [], scalar_prefetch = 0 : i64, scratch_operands = 0 : i64, tpu.core_type = #tpu.core_type<tc>} {
    %c0 = arith.constant 0 : index
    %c0_0 = arith.constant 0 : index
    %0 = vector.load %arg0[%c0, %c0_0] : memref<32x64xbf16, #tpu.memory_space<vmem>>, vector<32x64xbf16>
    %c0_1 = arith.constant 0 : index
    %c0_2 = arith.constant 0 : index
    %1 = vector.load %arg1[%c0_1, %c0_2] : memref<32x64xbf16, #tpu.memory_space<vmem>>, vector<32x64xbf16>
    %c0_3 = arith.constant 0 : index
    %c0_4 = arith.constant 0 : index
    %2 = vector.load %arg2[%c0_3, %c0_4] : memref<64x64xbf16, #tpu.memory_space<vmem>>, vector<64x64xbf16>
    %cst = arith.constant dense<0.000000e+00> : vector<32x64xf32>
    %3 = tpu.matmul %0, %2, %cst {dimension_numbers = #tpu.dot_dimension_numbers<[1], [0], [0], [1], [0, 0, 1, 1], [], []>} : vector<32x64xbf16>, vector<64x64xbf16>, vector<32x64xf32> -> vector<32x64xf32>
    %4 = arith.truncf %3 : vector<32x64xf32> to vector<32x64xbf16>
    %c0_5 = arith.constant 0 : index
    %c0_6 = arith.constant 0 : index
    %5 = vector.load %arg3[%c0_5, %c0_6] : memref<64x64xbf16, #tpu.memory_space<vmem>>, vector<64x64xbf16>
    %cst_7 = arith.constant dense<0.000000e+00> : vector<32x64xf32>
    %6 = tpu.matmul %1, %5, %cst_7 {dimension_numbers = #tpu.dot_dimension_numbers<[1], [0], [0], [1], [0, 0, 1, 1], [], []>} : vector<32x64xbf16>, vector<64x64xbf16>, vector<32x64xf32> -> vector<32x64xf32>
    %7 = arith.truncf %6 : vector<32x64xf32> to vector<32x64xbf16>
    %c0_8 = arith.constant 0 : index
    %c0_9 = arith.constant 0 : index
    %8 = vector.load %arg4[%c0_8, %c0_9] : memref<64x64xbf16, #tpu.memory_space<vmem>>, vector<64x64xbf16>
    %cst_10 = arith.constant dense<0.000000e+00> : vector<32x64xf32>
    %9 = tpu.matmul %1, %8, %cst_10 {dimension_numbers = #tpu.dot_dimension_numbers<[1], [0], [0], [1], [0, 0, 1, 1], [], []>} : vector<32x64xbf16>, vector<64x64xbf16>, vector<32x64xf32> -> vector<32x64xf32>
    %10 = arith.truncf %9 : vector<32x64xf32> to vector<32x64xbf16>
    %11 = vector.extract_strided_slice %4 {offsets = [0, 0], sizes = [16, 16], strides = [1, 1]} : vector<32x64xbf16> to vector<16x16xbf16>
    %12 = vector.extract_strided_slice %7 {offsets = [0, 0], sizes = [16, 16], strides = [1, 1]} : vector<32x64xbf16> to vector<16x16xbf16>
    %13 = vector.extract_strided_slice %10 {offsets = [0, 0], sizes = [16, 16], strides = [1, 1]} : vector<32x64xbf16> to vector<16x16xbf16>
    %cst_11 = arith.constant dense<0.000000e+00> : vector<16x16xf32>
    %14 = tpu.matmul %11, %12, %cst_11 {dimension_numbers = #tpu.dot_dimension_numbers<[1], [1], [0], [0], [0, 0, 1, 0], [], []>} : vector<16x16xbf16>, vector<16x16xbf16>, vector<16x16xf32> -> vector<16x16xf32>
    %c0_12 = arith.constant 0 : index
    %c0_13 = arith.constant 0 : index
    %c0_14 = arith.constant 0 : index
    %15 = vector.load %arg6[%c0_12, %c0_13, %c0_14] : memref<4x16x16xf32, #tpu.memory_space<vmem>>, vector<1x16x16xf32>
    %16 = vector.shape_cast %15 : vector<1x16x16xf32> to vector<16x16xf32>
    %17 = arith.addf %14, %16 : vector<16x16xf32>
    %c0_15 = arith.constant 0 : index
    %c0_16 = arith.constant 0 : index
    %c0_17 = arith.constant 0 : index
    %18 = vector.load %arg7[%c0_15, %c0_16, %c0_17] : memref<2x16x16xf32, #tpu.memory_space<vmem>>, vector<1x16x16xf32>
    %19 = vector.shape_cast %18 : vector<1x16x16xf32> to vector<16x16xf32>
    %20 = arith.addf %17, %19 : vector<16x16xf32>
    %cst_18 = arith.constant dense<0xFF800000> : vector<16xf32>
    %21 = vector.multi_reduction <maximumf>, %20, %cst_18 [1] : vector<16x16xf32> to vector<16xf32>
    %22 = vector.shape_cast %21 : vector<16xf32> to vector<16x1xf32>
    %23 = vector.broadcast %22 : vector<16x1xf32> to vector<16x16xf32>
    %24 = arith.subf %20, %23 : vector<16x16xf32>
    %25 = math.exp %24 : vector<16x16xf32>
    %cst_19 = arith.constant dense<0.000000e+00> : vector<16xf32>
    %26 = vector.multi_reduction <add>, %25, %cst_19 [1] : vector<16x16xf32> to vector<16xf32>
    %27 = vector.shape_cast %26 : vector<16xf32> to vector<16x1xf32>
    %28 = vector.broadcast %27 : vector<16x1xf32> to vector<16x16xf32>
    %29 = arith.divf %25, %28 : vector<16x16xf32>
    %30 = arith.truncf %29 : vector<16x16xf32> to vector<16x16xbf16>
    %cst_20 = arith.constant dense<0.000000e+00> : vector<16x16xf32>
    %31 = tpu.matmul %30, %13, %cst_20 {dimension_numbers = #tpu.dot_dimension_numbers<[1], [0], [0], [1], [0, 0, 1, 1], [], []>} : vector<16x16xbf16>, vector<16x16xbf16>, vector<16x16xf32> -> vector<16x16xf32>
    %32 = vector.extract_strided_slice %4 {offsets = [0, 16], sizes = [16, 16], strides = [1, 1]} : vector<32x64xbf16> to vector<16x16xbf16>
    %33 = vector.extract_strided_slice %7 {offsets = [0, 16], sizes = [16, 16], strides = [1, 1]} : vector<32x64xbf16> to vector<16x16xbf16>
    %34 = vector.extract_strided_slice %10 {offsets = [0, 16], sizes = [16, 16], strides = [1, 1]} : vector<32x64xbf16> to vector<16x16xbf16>
    %cst_21 = arith.constant dense<0.000000e+00> : vector<16x16xf32>
    %35 = tpu.matmul %32, %33, %cst_21 {dimension_numbers = #tpu.dot_dimension_numbers<[1], [1], [0], [0], [0, 0, 1, 0], [], []>} : vector<16x16xbf16>, vector<16x16xbf16>, vector<16x16xf32> -> vector<16x16xf32>
    %c1 = arith.constant 1 : index
    %c0_22 = arith.constant 0 : index
    %c0_23 = arith.constant 0 : index
    %36 = vector.load %arg6[%c1, %c0_22, %c0_23] : memref<4x16x16xf32, #tpu.memory_space<vmem>>, vector<1x16x16xf32>
    %37 = vector.shape_cast %36 : vector<1x16x16xf32> to vector<16x16xf32>
    %38 = arith.addf %35, %37 : vector<16x16xf32>
    %c0_24 = arith.constant 0 : index
    %c0_25 = arith.constant 0 : index
    %c0_26 = arith.constant 0 : index
    %39 = vector.load %arg7[%c0_24, %c0_25, %c0_26] : memref<2x16x16xf32, #tpu.memory_space<vmem>>, vector<1x16x16xf32>
    %40 = vector.shape_cast %39 : vector<1x16x16xf32> to vector<16x16xf32>
    %41 = arith.addf %38, %40 : vector<16x16xf32>
    %cst_27 = arith.constant dense<0xFF800000> : vector<16xf32>
    %42 = vector.multi_reduction <maximumf>, %41, %cst_27 [1] : vector<16x16xf32> to vector<16xf32>
    %43 = vector.shape_cast %42 : vector<16xf32> to vector<16x1xf32>
    %44 = vector.broadcast %43 : vector<16x1xf32> to vector<16x16xf32>
    %45 = arith.subf %41, %44 : vector<16x16xf32>
    %46 = math.exp %45 : vector<16x16xf32>
    %cst_28 = arith.constant dense<0.000000e+00> : vector<16xf32>
    %47 = vector.multi_reduction <add>, %46, %cst_28 [1] : vector<16x16xf32> to vector<16xf32>
    %48 = vector.shape_cast %47 : vector<16xf32> to vector<16x1xf32>
    %49 = vector.broadcast %48 : vector<16x1xf32> to vector<16x16xf32>
    %50 = arith.divf %46, %49 : vector<16x16xf32>
    %51 = arith.truncf %50 : vector<16x16xf32> to vector<16x16xbf16>
    %cst_29 = arith.constant dense<0.000000e+00> : vector<16x16xf32>
    %52 = tpu.matmul %51, %34, %cst_29 {dimension_numbers = #tpu.dot_dimension_numbers<[1], [0], [0], [1], [0, 0, 1, 1], [], []>} : vector<16x16xbf16>, vector<16x16xbf16>, vector<16x16xf32> -> vector<16x16xf32>
    %53 = vector.extract_strided_slice %4 {offsets = [0, 32], sizes = [16, 16], strides = [1, 1]} : vector<32x64xbf16> to vector<16x16xbf16>
    %54 = vector.extract_strided_slice %7 {offsets = [0, 32], sizes = [16, 16], strides = [1, 1]} : vector<32x64xbf16> to vector<16x16xbf16>
    %55 = vector.extract_strided_slice %10 {offsets = [0, 32], sizes = [16, 16], strides = [1, 1]} : vector<32x64xbf16> to vector<16x16xbf16>
    %cst_30 = arith.constant dense<0.000000e+00> : vector<16x16xf32>
    %56 = tpu.matmul %53, %54, %cst_30 {dimension_numbers = #tpu.dot_dimension_numbers<[1], [1], [0], [0], [0, 0, 1, 0], [], []>} : vector<16x16xbf16>, vector<16x16xbf16>, vector<16x16xf32> -> vector<16x16xf32>
    %c2 = arith.constant 2 : index
    %c0_31 = arith.constant 0 : index
    %c0_32 = arith.constant 0 : index
    %57 = vector.load %arg6[%c2, %c0_31, %c0_32] : memref<4x16x16xf32, #tpu.memory_space<vmem>>, vector<1x16x16xf32>
    %58 = vector.shape_cast %57 : vector<1x16x16xf32> to vector<16x16xf32>
    %59 = arith.addf %56, %58 : vector<16x16xf32>
    %c0_33 = arith.constant 0 : index
    %c0_34 = arith.constant 0 : index
    %c0_35 = arith.constant 0 : index
    %60 = vector.load %arg7[%c0_33, %c0_34, %c0_35] : memref<2x16x16xf32, #tpu.memory_space<vmem>>, vector<1x16x16xf32>
    %61 = vector.shape_cast %60 : vector<1x16x16xf32> to vector<16x16xf32>
    %62 = arith.addf %59, %61 : vector<16x16xf32>
    %cst_36 = arith.constant dense<0xFF800000> : vector<16xf32>
    %63 = vector.multi_reduction <maximumf>, %62, %cst_36 [1] : vector<16x16xf32> to vector<16xf32>
    %64 = vector.shape_cast %63 : vector<16xf32> to vector<16x1xf32>
    %65 = vector.broadcast %64 : vector<16x1xf32> to vector<16x16xf32>
    %66 = arith.subf %62, %65 : vector<16x16xf32>
    %67 = math.exp %66 : vector<16x16xf32>
    %cst_37 = arith.constant dense<0.000000e+00> : vector<16xf32>
    %68 = vector.multi_reduction <add>, %67, %cst_37 [1] : vector<16x16xf32> to vector<16xf32>
    %69 = vector.shape_cast %68 : vector<16xf32> to vector<16x1xf32>
    %70 = vector.broadcast %69 : vector<16x1xf32> to vector<16x16xf32>
    %71 = arith.divf %67, %70 : vector<16x16xf32>
    %72 = arith.truncf %71 : vector<16x16xf32> to vector<16x16xbf16>
    %cst_38 = arith.constant dense<0.000000e+00> : vector<16x16xf32>
    %73 = tpu.matmul %72, %55, %cst_38 {dimension_numbers = #tpu.dot_dimension_numbers<[1], [0], [0], [1], [0, 0, 1, 1], [], []>} : vector<16x16xbf16>, vector<16x16xbf16>, vector<16x16xf32> -> vector<16x16xf32>
    %74 = vector.extract_strided_slice %4 {offsets = [0, 48], sizes = [16, 16], strides = [1, 1]} : vector<32x64xbf16> to vector<16x16xbf16>
    %75 = vector.extract_strided_slice %7 {offsets = [0, 48], sizes = [16, 16], strides = [1, 1]} : vector<32x64xbf16> to vector<16x16xbf16>
    %76 = vector.extract_strided_slice %10 {offsets = [0, 48], sizes = [16, 16], strides = [1, 1]} : vector<32x64xbf16> to vector<16x16xbf16>
    %cst_39 = arith.constant dense<0.000000e+00> : vector<16x16xf32>
    %77 = tpu.matmul %74, %75, %cst_39 {dimension_numbers = #tpu.dot_dimension_numbers<[1], [1], [0], [0], [0, 0, 1, 0], [], []>} : vector<16x16xbf16>, vector<16x16xbf16>, vector<16x16xf32> -> vector<16x16xf32>
    %c3 = arith.constant 3 : index
    %c0_40 = arith.constant 0 : index
    %c0_41 = arith.constant 0 : index
    %78 = vector.load %arg6[%c3, %c0_40, %c0_41] : memref<4x16x16xf32, #tpu.memory_space<vmem>>, vector<1x16x16xf32>
    %79 = vector.shape_cast %78 : vector<1x16x16xf32> to vector<16x16xf32>
    %80 = arith.addf %77, %79 : vector<16x16xf32>
    %c0_42 = arith.constant 0 : index
    %c0_43 = arith.constant 0 : index
    %c0_44 = arith.constant 0 : index
    %81 = vector.load %arg7[%c0_42, %c0_43, %c0_44] : memref<2x16x16xf32, #tpu.memory_space<vmem>>, vector<1x16x16xf32>
    %82 = vector.shape_cast %81 : vector<1x16x16xf32> to vector<16x16xf32>
    %83 = arith.addf %80, %82 : vector<16x16xf32>
    %cst_45 = arith.constant dense<0xFF800000> : vector<16xf32>
    %84 = vector.multi_reduction <maximumf>, %83, %cst_45 [1] : vector<16x16xf32> to vector<16xf32>
    %85 = vector.shape_cast %84 : vector<16xf32> to vector<16x1xf32>
    %86 = vector.broadcast %85 : vector<16x1xf32> to vector<16x16xf32>
    %87 = arith.subf %83, %86 : vector<16x16xf32>
    %88 = math.exp %87 : vector<16x16xf32>
    %cst_46 = arith.constant dense<0.000000e+00> : vector<16xf32>
    %89 = vector.multi_reduction <add>, %88, %cst_46 [1] : vector<16x16xf32> to vector<16xf32>
    %90 = vector.shape_cast %89 : vector<16xf32> to vector<16x1xf32>
    %91 = vector.broadcast %90 : vector<16x1xf32> to vector<16x16xf32>
    %92 = arith.divf %88, %91 : vector<16x16xf32>
    %93 = arith.truncf %92 : vector<16x16xf32> to vector<16x16xbf16>
    %cst_47 = arith.constant dense<0.000000e+00> : vector<16x16xf32>
    %94 = tpu.matmul %93, %76, %cst_47 {dimension_numbers = #tpu.dot_dimension_numbers<[1], [0], [0], [1], [0, 0, 1, 1], [], []>} : vector<16x16xbf16>, vector<16x16xbf16>, vector<16x16xf32> -> vector<16x16xf32>
    %95 = tpu.concatenate %31, %52, %73, %94 in 1 : vector<16x16xf32>, vector<16x16xf32>, vector<16x16xf32>, vector<16x16xf32> -> vector<16x64xf32>
    %96 = vector.extract_strided_slice %4 {offsets = [16, 0], sizes = [16, 16], strides = [1, 1]} : vector<32x64xbf16> to vector<16x16xbf16>
    %97 = vector.extract_strided_slice %7 {offsets = [16, 0], sizes = [16, 16], strides = [1, 1]} : vector<32x64xbf16> to vector<16x16xbf16>
    %98 = vector.extract_strided_slice %10 {offsets = [16, 0], sizes = [16, 16], strides = [1, 1]} : vector<32x64xbf16> to vector<16x16xbf16>
    %cst_48 = arith.constant dense<0.000000e+00> : vector<16x16xf32>
    %99 = tpu.matmul %96, %97, %cst_48 {dimension_numbers = #tpu.dot_dimension_numbers<[1], [1], [0], [0], [0, 0, 1, 0], [], []>} : vector<16x16xbf16>, vector<16x16xbf16>, vector<16x16xf32> -> vector<16x16xf32>
    %c0_49 = arith.constant 0 : index
    %c0_50 = arith.constant 0 : index
    %c0_51 = arith.constant 0 : index
    %100 = vector.load %arg6[%c0_49, %c0_50, %c0_51] : memref<4x16x16xf32, #tpu.memory_space<vmem>>, vector<1x16x16xf32>
    %101 = vector.shape_cast %100 : vector<1x16x16xf32> to vector<16x16xf32>
    %102 = arith.addf %99, %101 : vector<16x16xf32>
    %c1_52 = arith.constant 1 : index
    %c0_53 = arith.constant 0 : index
    %c0_54 = arith.constant 0 : index
    %103 = vector.load %arg7[%c1_52, %c0_53, %c0_54] : memref<2x16x16xf32, #tpu.memory_space<vmem>>, vector<1x16x16xf32>
    %104 = vector.shape_cast %103 : vector<1x16x16xf32> to vector<16x16xf32>
    %105 = arith.addf %102, %104 : vector<16x16xf32>
    %cst_55 = arith.constant dense<0xFF800000> : vector<16xf32>
    %106 = vector.multi_reduction <maximumf>, %105, %cst_55 [1] : vector<16x16xf32> to vector<16xf32>
    %107 = vector.shape_cast %106 : vector<16xf32> to vector<16x1xf32>
    %108 = vector.broadcast %107 : vector<16x1xf32> to vector<16x16xf32>
    %109 = arith.subf %105, %108 : vector<16x16xf32>
    %110 = math.exp %109 : vector<16x16xf32>
    %cst_56 = arith.constant dense<0.000000e+00> : vector<16xf32>
    %111 = vector.multi_reduction <add>, %110, %cst_56 [1] : vector<16x16xf32> to vector<16xf32>
    %112 = vector.shape_cast %111 : vector<16xf32> to vector<16x1xf32>
    %113 = vector.broadcast %112 : vector<16x1xf32> to vector<16x16xf32>
    %114 = arith.divf %110, %113 : vector<16x16xf32>
    %115 = arith.truncf %114 : vector<16x16xf32> to vector<16x16xbf16>
    %cst_57 = arith.constant dense<0.000000e+00> : vector<16x16xf32>
    %116 = tpu.matmul %115, %98, %cst_57 {dimension_numbers = #tpu.dot_dimension_numbers<[1], [0], [0], [1], [0, 0, 1, 1], [], []>} : vector<16x16xbf16>, vector<16x16xbf16>, vector<16x16xf32> -> vector<16x16xf32>
    %117 = vector.extract_strided_slice %4 {offsets = [16, 16], sizes = [16, 16], strides = [1, 1]} : vector<32x64xbf16> to vector<16x16xbf16>
    %118 = vector.extract_strided_slice %7 {offsets = [16, 16], sizes = [16, 16], strides = [1, 1]} : vector<32x64xbf16> to vector<16x16xbf16>
    %119 = vector.extract_strided_slice %10 {offsets = [16, 16], sizes = [16, 16], strides = [1, 1]} : vector<32x64xbf16> to vector<16x16xbf16>
    %cst_58 = arith.constant dense<0.000000e+00> : vector<16x16xf32>
    %120 = tpu.matmul %117, %118, %cst_58 {dimension_numbers = #tpu.dot_dimension_numbers<[1], [1], [0], [0], [0, 0, 1, 0], [], []>} : vector<16x16xbf16>, vector<16x16xbf16>, vector<16x16xf32> -> vector<16x16xf32>
    %c1_59 = arith.constant 1 : index
    %c0_60 = arith.constant 0 : index
    %c0_61 = arith.constant 0 : index
    %121 = vector.load %arg6[%c1_59, %c0_60, %c0_61] : memref<4x16x16xf32, #tpu.memory_space<vmem>>, vector<1x16x16xf32>
    %122 = vector.shape_cast %121 : vector<1x16x16xf32> to vector<16x16xf32>
    %123 = arith.addf %120, %122 : vector<16x16xf32>
    %c1_62 = arith.constant 1 : index
    %c0_63 = arith.constant 0 : index
    %c0_64 = arith.constant 0 : index
    %124 = vector.load %arg7[%c1_62, %c0_63, %c0_64] : memref<2x16x16xf32, #tpu.memory_space<vmem>>, vector<1x16x16xf32>
    %125 = vector.shape_cast %124 : vector<1x16x16xf32> to vector<16x16xf32>
    %126 = arith.addf %123, %125 : vector<16x16xf32>
    %cst_65 = arith.constant dense<0xFF800000> : vector<16xf32>
    %127 = vector.multi_reduction <maximumf>, %126, %cst_65 [1] : vector<16x16xf32> to vector<16xf32>
    %128 = vector.shape_cast %127 : vector<16xf32> to vector<16x1xf32>
    %129 = vector.broadcast %128 : vector<16x1xf32> to vector<16x16xf32>
    %130 = arith.subf %126, %129 : vector<16x16xf32>
    %131 = math.exp %130 : vector<16x16xf32>
    %cst_66 = arith.constant dense<0.000000e+00> : vector<16xf32>
    %132 = vector.multi_reduction <add>, %131, %cst_66 [1] : vector<16x16xf32> to vector<16xf32>
    %133 = vector.shape_cast %132 : vector<16xf32> to vector<16x1xf32>
    %134 = vector.broadcast %133 : vector<16x1xf32> to vector<16x16xf32>
    %135 = arith.divf %131, %134 : vector<16x16xf32>
    %136 = arith.truncf %135 : vector<16x16xf32> to vector<16x16xbf16>
    %cst_67 = arith.constant dense<0.000000e+00> : vector<16x16xf32>
    %137 = tpu.matmul %136, %119, %cst_67 {dimension_numbers = #tpu.dot_dimension_numbers<[1], [0], [0], [1], [0, 0, 1, 1], [], []>} : vector<16x16xbf16>, vector<16x16xbf16>, vector<16x16xf32> -> vector<16x16xf32>
    %138 = vector.extract_strided_slice %4 {offsets = [16, 32], sizes = [16, 16], strides = [1, 1]} : vector<32x64xbf16> to vector<16x16xbf16>
    %139 = vector.extract_strided_slice %7 {offsets = [16, 32], sizes = [16, 16], strides = [1, 1]} : vector<32x64xbf16> to vector<16x16xbf16>
    %140 = vector.extract_strided_slice %10 {offsets = [16, 32], sizes = [16, 16], strides = [1, 1]} : vector<32x64xbf16> to vector<16x16xbf16>
    %cst_68 = arith.constant dense<0.000000e+00> : vector<16x16xf32>
    %141 = tpu.matmul %138, %139, %cst_68 {dimension_numbers = #tpu.dot_dimension_numbers<[1], [1], [0], [0], [0, 0, 1, 0], [], []>} : vector<16x16xbf16>, vector<16x16xbf16>, vector<16x16xf32> -> vector<16x16xf32>
    %c2_69 = arith.constant 2 : index
    %c0_70 = arith.constant 0 : index
    %c0_71 = arith.constant 0 : index
    %142 = vector.load %arg6[%c2_69, %c0_70, %c0_71] : memref<4x16x16xf32, #tpu.memory_space<vmem>>, vector<1x16x16xf32>
    %143 = vector.shape_cast %142 : vector<1x16x16xf32> to vector<16x16xf32>
    %144 = arith.addf %141, %143 : vector<16x16xf32>
    %c1_72 = arith.constant 1 : index
    %c0_73 = arith.constant 0 : index
    %c0_74 = arith.constant 0 : index
    %145 = vector.load %arg7[%c1_72, %c0_73, %c0_74] : memref<2x16x16xf32, #tpu.memory_space<vmem>>, vector<1x16x16xf32>
    %146 = vector.shape_cast %145 : vector<1x16x16xf32> to vector<16x16xf32>
    %147 = arith.addf %144, %146 : vector<16x16xf32>
    %cst_75 = arith.constant dense<0xFF800000> : vector<16xf32>
    %148 = vector.multi_reduction <maximumf>, %147, %cst_75 [1] : vector<16x16xf32> to vector<16xf32>
    %149 = vector.shape_cast %148 : vector<16xf32> to vector<16x1xf32>
    %150 = vector.broadcast %149 : vector<16x1xf32> to vector<16x16xf32>
    %151 = arith.subf %147, %150 : vector<16x16xf32>
    %152 = math.exp %151 : vector<16x16xf32>
    %cst_76 = arith.constant dense<0.000000e+00> : vector<16xf32>
    %153 = vector.multi_reduction <add>, %152, %cst_76 [1] : vector<16x16xf32> to vector<16xf32>
    %154 = vector.shape_cast %153 : vector<16xf32> to vector<16x1xf32>
    %155 = vector.broadcast %154 : vector<16x1xf32> to vector<16x16xf32>
    %156 = arith.divf %152, %155 : vector<16x16xf32>
    %157 = arith.truncf %156 : vector<16x16xf32> to vector<16x16xbf16>
    %cst_77 = arith.constant dense<0.000000e+00> : vector<16x16xf32>
    %158 = tpu.matmul %157, %140, %cst_77 {dimension_numbers = #tpu.dot_dimension_numbers<[1], [0], [0], [1], [0, 0, 1, 1], [], []>} : vector<16x16xbf16>, vector<16x16xbf16>, vector<16x16xf32> -> vector<16x16xf32>
    %159 = vector.extract_strided_slice %4 {offsets = [16, 48], sizes = [16, 16], strides = [1, 1]} : vector<32x64xbf16> to vector<16x16xbf16>
    %160 = vector.extract_strided_slice %7 {offsets = [16, 48], sizes = [16, 16], strides = [1, 1]} : vector<32x64xbf16> to vector<16x16xbf16>
    %161 = vector.extract_strided_slice %10 {offsets = [16, 48], sizes = [16, 16], strides = [1, 1]} : vector<32x64xbf16> to vector<16x16xbf16>
    %cst_78 = arith.constant dense<0.000000e+00> : vector<16x16xf32>
    %162 = tpu.matmul %159, %160, %cst_78 {dimension_numbers = #tpu.dot_dimension_numbers<[1], [1], [0], [0], [0, 0, 1, 0], [], []>} : vector<16x16xbf16>, vector<16x16xbf16>, vector<16x16xf32> -> vector<16x16xf32>
    %c3_79 = arith.constant 3 : index
    %c0_80 = arith.constant 0 : index
    %c0_81 = arith.constant 0 : index
    %163 = vector.load %arg6[%c3_79, %c0_80, %c0_81] : memref<4x16x16xf32, #tpu.memory_space<vmem>>, vector<1x16x16xf32>
    %164 = vector.shape_cast %163 : vector<1x16x16xf32> to vector<16x16xf32>
    %165 = arith.addf %162, %164 : vector<16x16xf32>
    %c1_82 = arith.constant 1 : index
    %c0_83 = arith.constant 0 : index
    %c0_84 = arith.constant 0 : index
    %166 = vector.load %arg7[%c1_82, %c0_83, %c0_84] : memref<2x16x16xf32, #tpu.memory_space<vmem>>, vector<1x16x16xf32>
    %167 = vector.shape_cast %166 : vector<1x16x16xf32> to vector<16x16xf32>
    %168 = arith.addf %165, %167 : vector<16x16xf32>
    %cst_85 = arith.constant dense<0xFF800000> : vector<16xf32>
    %169 = vector.multi_reduction <maximumf>, %168, %cst_85 [1] : vector<16x16xf32> to vector<16xf32>
    %170 = vector.shape_cast %169 : vector<16xf32> to vector<16x1xf32>
    %171 = vector.broadcast %170 : vector<16x1xf32> to vector<16x16xf32>
    %172 = arith.subf %168, %171 : vector<16x16xf32>
    %173 = math.exp %172 : vector<16x16xf32>
    %cst_86 = arith.constant dense<0.000000e+00> : vector<16xf32>
    %174 = vector.multi_reduction <add>, %173, %cst_86 [1] : vector<16x16xf32> to vector<16xf32>
    %175 = vector.shape_cast %174 : vector<16xf32> to vector<16x1xf32>
    %176 = vector.broadcast %175 : vector<16x1xf32> to vector<16x16xf32>
    %177 = arith.divf %173, %176 : vector<16x16xf32>
    %178 = arith.truncf %177 : vector<16x16xf32> to vector<16x16xbf16>
    %cst_87 = arith.constant dense<0.000000e+00> : vector<16x16xf32>
    %179 = tpu.matmul %178, %161, %cst_87 {dimension_numbers = #tpu.dot_dimension_numbers<[1], [0], [0], [1], [0, 0, 1, 1], [], []>} : vector<16x16xbf16>, vector<16x16xbf16>, vector<16x16xf32> -> vector<16x16xf32>
    %180 = tpu.concatenate %116, %137, %158, %179 in 1 : vector<16x16xf32>, vector<16x16xf32>, vector<16x16xf32>, vector<16x16xf32> -> vector<16x64xf32>
    %181 = tpu.concatenate %95, %180 in 0 : vector<16x64xf32>, vector<16x64xf32> -> vector<32x64xf32>
    %182 = arith.truncf %181 : vector<32x64xf32> to vector<32x64xbf16>
    %c0_88 = arith.constant 0 : index
    %c0_89 = arith.constant 0 : index
    %183 = vector.load %arg5[%c0_88, %c0_89] : memref<64x64xbf16, #tpu.memory_space<vmem>>, vector<64x64xbf16>
    %cst_90 = arith.constant dense<0.000000e+00> : vector<32x64xf32>
    %184 = tpu.matmul %182, %183, %cst_90 {dimension_numbers = #tpu.dot_dimension_numbers<[1], [0], [0], [1], [0, 0, 1, 1], [], []>} : vector<32x64xbf16>, vector<64x64xbf16>, vector<32x64xf32> -> vector<32x64xf32>
    %c0_91 = arith.constant 0 : index
    %c0_92 = arith.constant 0 : index
    %185 = vector.load %arg8[%c0_91, %c0_92] : memref<32x64xf32, #tpu.memory_space<vmem>>, vector<32x64xf32>
    tpu.vector_store %arg8[%c0_91, %c0_92], %184 {strides = array<i32>} : memref<32x64xf32, #tpu.memory_space<vmem>>, vector<32x64xf32>,
    return
  }
}

</mosaic_0001>

<llo_original>
// kernel: tpu_custom_call.1
$region0: #{tpu_custom_call.1}
  #allocation0 [shape = 'u32[]', space=smem, size = 0x4, offset = 0x4, fixed_abs, tag = 'smem constant byte address 0x4 - core index']
  #allocation1 [shape = 'u32[144,128]{1,0:T(1,128)}', space=vmem, size = 0x12000, scoped, tag = 'internal scratch']
  %s0 = inlined_call_operand.hbm [shape: bf16[32,64], index: 0, kind: input, shape index: {}]
  %s1 = inlined_call_operand.hbm [shape: bf16[32,64], index: 1, kind: input, shape index: {}]
  %s2 = inlined_call_operand.hbm [shape: bf16[64,64], index: 2, kind: input, shape index: {}]
  %s3 = inlined_call_operand.hbm [shape: bf16[64,64], index: 3, kind: input, shape index: {}]
  %s4 = inlined_call_operand.hbm [shape: bf16[64,64], index: 4, kind: input, shape index: {}]
  %s5 = inlined_call_operand.hbm [shape: bf16[64,64], index: 5, kind: input, shape index: {}]
  %s6 = inlined_call_operand.hbm [shape: f32[4,16,16], index: 6, kind: input, shape index: {}]
  %s7 = inlined_call_operand.hbm [shape: f32[2,16,16], index: 7, kind: input, shape index: {}]
  %s8 = inlined_call_operand.hbm [shape: f32[32,64], index: 8, kind: output, shape index: {}]
  %s9 = sld [smem:[#allocation0]]
  $region74: #{tpu_custom_call.1} parent=0
    _
  %s11 = ssub.s32 1, %s9
  %s12 = scalar_select 0, %s11, %s9
  $region1: #{tpu_custom_call.1} parent=0
    #allocation2 [shape = 'u8[8192]{0}', space=vmem, size = 0x2000, scoped, tag = 'input window, operand 0, single buffered']
    #allocation3 [shape = 's32[1]{0}', space=sflag, size = 0x4, scoped, tag = 'scoped memory for tpu_custom_call.1']
    #allocation4 [shape = 's32[1]{0}', space=sflag, size = 0x4, scoped, tag = 'scoped memory for tpu_custom_call.1']
    #allocation5 [shape = 'u8[8192]{0}', space=vmem, size = 0x2000, scoped, tag = 'input window, operand 1, single buffered']
    #allocation6 [shape = 's32[1]{0}', space=sflag, size = 0x4, scoped, tag = 'scoped memory for tpu_custom_call.1']
    #allocation7 [shape = 'u8[16384]{0}', space=vmem, size = 0x4000, scoped, tag = 'input window, operand 2, single buffered']
    #allocation8 [shape = 'u8[16384]{0}', space=vmem, size = 0x4000, scoped, tag = 'input window, operand 3, single buffered']
    #allocation9 [shape = 's32[1]{0}', space=sflag, size = 0x4, scoped, tag = 'scoped memory for tpu_custom_call.1']
    #allocation10 [shape = 'u8[16384]{0}', space=vmem, size = 0x4000, scoped, tag = 'input window, operand 4, single buffered']
    #allocation11 [shape = 'u8[16384]{0}', space=vmem, size = 0x4000, scoped, tag = 'input window, operand 5, single buffered']
    #allocation12 [shape = 's32[1]{0}', space=sflag, size = 0x4, scoped, tag = 'scoped memory for tpu_custom_call.1']
    #allocation13 [shape = 'u8[32768]{0}', space=vmem, size = 0x8000, scoped, tag = 'input window, operand 6, single buffered']
    #allocation14 [shape = 'u8[16384]{0}', space=vmem, size = 0x4000, scoped, tag = 'input window, operand 7, single buffered']
    #allocation15 [shape = 's32[1]{0}', space=sflag, size = 0x4, scoped, tag = 'scoped memory for tpu_custom_call.1']
    #allocation16 [shape = 'u8[16384]{0}', space=vmem, size = 0x4000, scoped, tag = 'output window, operand 0, single buffered']
    %13 = vsyncpa [#allocation3], 0
    %14 = vsyncpa [#allocation6], 0
    %15 = vsyncpa [#allocation9], 0
    %16 = vsyncpa [#allocation12], 0
    %17 = vsyncpa [#allocation15], 0
    %18 = vsyncpa [#allocation4], 0
    // Predicated region
    $region2: #{tpu_custom_call.1} parent=1 // pred_check
      _
    $region3: #{tpu_custom_call.1} parent=1 // pred_check_branch
      %20 = sbr.rel (0) target = $region5
    $region4: #{tpu_custom_call.1} parent=1 // pred_region
      %s22 = ssub.s32 256, 256
      %23 = vsyncadd [#allocation3], %s22
      %s24 = sshll.u32 [#allocation2], 4
      %s25 = int_to_ptr.vmem [resolvable:$true] %s24
      %30 = dma.hbm_to_vmem [thread:$0]  %s0, 256, %s25, [#allocation3], 64, 64, 4
    $region5: #{tpu_custom_call.1} parent=1 // pred_fallthru
      _
    // Predicated region
    $region6: #{tpu_custom_call.1} parent=1 // pred_check
      _
    $region7: #{tpu_custom_call.1} parent=1 // pred_check_branch
      %32 = sbr.rel (0) target = $region9
    $region8: #{tpu_custom_call.1} parent=1 // pred_region
      %s34 = ssub.s32 256, 256
      %35 = vsyncadd [#allocation6], %s34
      %s36 = sshll.u32 [#allocation5], 4
      %s37 = int_to_ptr.vmem [resolvable:$true] %s36
      %42 = dma.hbm_to_vmem [thread:$0]  %s1, 256, %s37, [#allocation6], 64, 64, 4
    $region9: #{tpu_custom_call.1} parent=1 // pred_fallthru
      _
    // Predicated region
    $region10: #{tpu_custom_call.1} parent=1 // pred_check
      _
    $region11: #{tpu_custom_call.1} parent=1 // pred_check_branch
      %44 = sbr.rel (0) target = $region13
    $region12: #{tpu_custom_call.1} parent=1 // pred_region
      %s46 = ssub.s32 512, 512
      %47 = vsyncadd [#allocation6], %s46
      %s48 = sshll.u32 [#allocation7], 4
      %s49 = int_to_ptr.vmem [resolvable:$true] %s48
      %54 = dma.hbm_to_vmem [thread:$0]  %s2, 512, %s49, [#allocation6], 64, 64, 4
    $region13: #{tpu_custom_call.1} parent=1 // pred_fallthru
      _
    // Predicated region
    $region14: #{tpu_custom_call.1} parent=1 // pred_check
      _
    $region15: #{tpu_custom_call.1} parent=1 // pred_check_branch
      %56 = sbr.rel (0) target = $region17
    $region16: #{tpu_custom_call.1} parent=1 // pred_region
      %s58 = ssub.s32 512, 512
      %59 = vsyncadd [#allocation9], %s58
      %s60 = sshll.u32 [#allocation8], 4
      %s61 = int_to_ptr.vmem [resolvable:$true] %s60
      %66 = dma.hbm_to_vmem [thread:$0]  %s3, 512, %s61, [#allocation9], 64, 64, 4
    $region17: #{tpu_custom_call.1} parent=1 // pred_fallthru
      _
    // Predicated region
    $region18: #{tpu_custom_call.1} parent=1 // pred_check
      _
    $region19: #{tpu_custom_call.1} parent=1 // pred_check_branch
      %68 = sbr.rel (0) target = $region21
    $region20: #{tpu_custom_call.1} parent=1 // pred_region
      %s70 = ssub.s32 512, 512
      %71 = vsyncadd [#allocation9], %s70
      %s72 = sshll.u32 [#allocation10], 4
      %s73 = int_to_ptr.vmem [resolvable:$true] %s72
      %78 = dma.hbm_to_vmem [thread:$0]  %s4, 512, %s73, [#allocation9], 64, 64, 4
    $region21: #{tpu_custom_call.1} parent=1 // pred_fallthru
      _
    // Predicated region
    $region22: #{tpu_custom_call.1} parent=1 // pred_check
      _
    $region23: #{tpu_custom_call.1} parent=1 // pred_check_branch
      %80 = sbr.rel (0) target = $region25
    $region24: #{tpu_custom_call.1} parent=1 // pred_region
      %s82 = ssub.s32 512, 512
      %83 = vsyncadd [#allocation12], %s82
      %s84 = sshll.u32 [#allocation11], 4
      %s85 = int_to_ptr.vmem [resolvable:$true] %s84
      %90 = dma.hbm_to_vmem [thread:$0]  %s5, 512, %s85, [#allocation12], 64, 64, 4
    $region25: #{tpu_custom_call.1} parent=1 // pred_fallthru
      _
    // Predicated region
    $region26: #{tpu_custom_call.1} parent=1 // pred_check
      _
    $region27: #{tpu_custom_call.1} parent=1 // pred_check_branch
      %92 = sbr.rel (0) target = $region29
    $region28: #{tpu_custom_call.1} parent=1 // pred_region
      %s94 = ssub.s32 1024, 1024
      %95 = vsyncadd [#allocation12], %s94
      %s96 = sshll.u32 [#allocation13], 4
      %s97 = int_to_ptr.vmem [resolvable:$true] %s96
      %102 = dma.hbm_to_vmem [thread:$0]  %s6, 1024, %s97, [#allocation12], 128, 128, 8
    $region29: #{tpu_custom_call.1} parent=1 // pred_fallthru
      _
    // Predicated region
    $region30: #{tpu_custom_call.1} parent=1 // pred_check
      _
    $region31: #{tpu_custom_call.1} parent=1 // pred_check_branch
      %104 = sbr.rel (0) target = $region33
    $region32: #{tpu_custom_call.1} parent=1 // pred_region
      %s106 = ssub.s32 512, 512
      %107 = vsyncadd [#allocation15], %s106
      %s108 = sshll.u32 [#allocation14], 4
      %s109 = int_to_ptr.vmem [resolvable:$true] %s108
      %114 = dma.hbm_to_vmem [thread:$0]  %s7, 512, %s109, [#allocation15], 128, 128, 8
    $region33: #{tpu_custom_call.1} parent=1 // pred_fallthru
      _
    // Predicated region
    $region34: #{tpu_custom_call.1} parent=1 // pred_check
      _
    $region35: #{tpu_custom_call.1} parent=1 // pred_check_branch
      %116 = sbr.rel (0) target = $region37
    $region36: #{tpu_custom_call.1} parent=1 // pred_region
      %117 = dma.done [#allocation3], 256
    $region37: #{tpu_custom_call.1} parent=1 // pred_fallthru
      _
    // Predicated region
    $region38: #{tpu_custom_call.1} parent=1 // pred_check
      _
    $region39: #{tpu_custom_call.1} parent=1 // pred_check_branch
      %119 = sbr.rel (0) target = $region41
    $region40: #{tpu_custom_call.1} parent=1 // pred_region
      %120 = dma.done [#allocation6], 256
    $region41: #{tpu_custom_call.1} parent=1 // pred_fallthru
      _
    // Predicated region
    $region42: #{tpu_custom_call.1} parent=1 // pred_check
      _
    $region43: #{tpu_custom_call.1} parent=1 // pred_check_branch
      %122 = sbr.rel (0) target = $region45
    $region44: #{tpu_custom_call.1} parent=1 // pred_region
      %123 = dma.done [#allocation6], 512
    $region45: #{tpu_custom_call.1} parent=1 // pred_fallthru
      _
    // Predicated region
    $region46: #{tpu_custom_call.1} parent=1 // pred_check
      _
    $region47: #{tpu_custom_call.1} parent=1 // pred_check_branch
      %125 = sbr.rel (0) target = $region49
    $region48: #{tpu_custom_call.1} parent=1 // pred_region
      %126 = dma.done [#allocation9], 512
    $region49: #{tpu_custom_call.1} parent=1 // pred_fallthru
      _
    // Predicated region
    $region50: #{tpu_custom_call.1} parent=1 // pred_check
      _
    $region51: #{tpu_custom_call.1} parent=1 // pred_check_branch
      %128 = sbr.rel (0) target = $region53
    $region52: #{tpu_custom_call.1} parent=1 // pred_region
      %129 = dma.done [#allocation9], 512
    $region53: #{tpu_custom_call.1} parent=1 // pred_fallthru
      _
    // Predicated region
    $region54: #{tpu_custom_call.1} parent=1 // pred_check
      _
    $region55: #{tpu_custom_call.1} parent=1 // pred_check_branch
      %131 = sbr.rel (0) target = $region57
    $region56: #{tpu_custom_call.1} parent=1 // pred_region
      %132 = dma.done [#allocation12], 512
    $region57: #{tpu_custom_call.1} parent=1 // pred_fallthru
      _
    // Predicated region
    $region58: #{tpu_custom_call.1} parent=1 // pred_check
      _
    $region59: #{tpu_custom_call.1} parent=1 // pred_check_branch
      %134 = sbr.rel (0) target = $region61
    $region60: #{tpu_custom_call.1} parent=1 // pred_region
      %135 = dma.done [#allocation12], 1024
    $region61: #{tpu_custom_call.1} parent=1 // pred_fallthru
      _
    // Predicated region
    $region62: #{tpu_custom_call.1} parent=1 // pred_check
      _
    $region63: #{tpu_custom_call.1} parent=1 // pred_check_branch
      %137 = sbr.rel (0) target = $region65
    $region64: #{tpu_custom_call.1} parent=1 // pred_region
      %138 = dma.done [#allocation15], 512
    $region65: #{tpu_custom_call.1} parent=1 // pred_fallthru
      _
    %v140 = vld [vmem:[#allocation2] sm:$0xf]
    %v141 = vld [vmem:[#allocation2 + $0x4] sm:$0xf]
    %v142 = vld [vmem:[#allocation2 + $0x8] sm:$0xf]
    %v143 = vld [vmem:[#allocation2 + $0xc] sm:$0xf]
    %v144 = vld [vmem:[#allocation5] sm:$0xf]
    %v145 = vld [vmem:[#allocation5 + $0x4] sm:$0xf]
    %v146 = vld [vmem:[#allocation5 + $0x8] sm:$0xf]
    %v147 = vld [vmem:[#allocation5 + $0xc] sm:$0xf]
    %v148 = vld [vmem:[#allocation7] sm:$0xf]
    %v149 = vld [vmem:[#allocation7 + $0x4] sm:$0xf]
    %v150 = vld [vmem:[#allocation7 + $0x8] sm:$0xf]
    %v151 = vld [vmem:[#allocation7 + $0xc] sm:$0xf]
    %v152 = vld [vmem:[#allocation7 + $0x10] sm:$0xf]
    %v153 = vld [vmem:[#allocation7 + $0x14] sm:$0xf]
    %v154 = vld [vmem:[#allocation7 + $0x18] sm:$0xf]
    %v155 = vld [vmem:[#allocation7 + $0x1c] sm:$0xf]
    %v160 = vunpack.c.l.b16 %v140
    %v161 = vunpack.c.l.b16 %v141
    %v162 = vunpack.c.l.b16 %v142
    %v163 = vunpack.c.l.b16 %v143
    %v164 = vpack.c.b16 %v161, %v160
    %v165 = vpack.c.b16 %v163, %v162
    %v174 = vunpack.c.l.b16 %v148
    %v175 = vunpack.c.l.b16 %v149
    %v176 = vunpack.c.l.b16 %v150
    %v177 = vunpack.c.l.b16 %v151
    %v178 = vunpack.c.l.b16 %v152
    %v179 = vunpack.c.l.b16 %v153
    %v180 = vunpack.c.l.b16 %v154
    %v181 = vunpack.c.l.b16 %v155
    %v182 = vpack.c.b16 %v175, %v174
    %v183 = vpack.c.b16 %v177, %v176
    %v184 = vpack.c.b16 %v179, %v178
    %v185 = vpack.c.b16 %v181, %v180
    %vm190 = vcmask 523264
    %v192 = vsel %vm190, %v164, 0
    %v195 = vsel %vm190, %v165, 0
    %197 = vmatprep.subr.bf16.mxu0 0
    %198 = vmatpush1.bf16.msra.mxu0 %v182
    %199 = vmatprep.subr.bf16.mxu0 0
    %200 = vmatpush1.bf16.msra.mxu0 %v183
    %201 = vmatprep.subr.bf16.mxu0 0
    %202 = vmatpush1.bf16.msra.mxu0 %v184
    %203 = vmatprep.subr.bf16.mxu0 0
    %204 = vmatpush1.bf16.msra.mxu0 %v185
    %205 = vmatprep.subr.bf16.mxu0 0
    %206 = vmatpush1.bf16.msra.mxu0 0
    %207 = vmatprep.subr.bf16.mxu0 0
    %208 = vmatpush1.bf16.msra.mxu0 0
    %209 = vmatprep.subr.bf16.mxu0 0
    %210 = vmatpush1.bf16.msra.mxu0 0
    %211 = vmatprep.subr.bf16.mxu0 0
    %212 = vmatpush1.bf16.msra.mxu0 0
    %213 = vmatprep.subr.bf16.mxu0 0
    %214 = vmatpush1.bf16.msra.mxu0 0
    %215 = vmatprep.subr.bf16.mxu0 0
    %216 = vmatpush1.bf16.msra.mxu0 0
    %217 = vmatprep.subr.bf16.mxu0 0
    %218 = vmatpush1.bf16.msra.mxu0 0
    %219 = vmatprep.subr.bf16.mxu0 0
    %220 = vmatpush1.bf16.msra.mxu0 0
    %221 = vmatprep.subr.bf16.mxu0 0
    %222 = vmatpush1.bf16.msra.mxu0 0
    %223 = vmatprep.subr.bf16.mxu0 0
    %224 = vmatpush1.bf16.msra.mxu0 0
    %225 = vmatprep.subr.bf16.mxu0 0
    %226 = vmatpush1.bf16.msra.mxu0 0
    %227 = vmatprep.subr.bf16.mxu0 0
    %228 = vmatpush1.bf16.msra.mxu0 0
    %229 = vmatprep.mubr.bf16.mxu0 0
    %230 = vmatmul.mubr.bf16.gmra.mrb[0].mxu0 %v192
    %v231 = vpop.f32.mrb[0].mxu0
    %v232 = vadd.f32 0.0, %v231
    %v233 = vpop.f32.mrb[0].mxu0
    %v234 = vpop.f32.mrb[0].mxu0
    %v235 = vadd.f32 0.0, %v234
    %v236 = vpop.f32.mrb[0].mxu0
    %237 = vmatprep.mubr.bf16.mxu0 0
    %238 = vmatmul.mubr.bf16.gmra.mrb[0].mxu0 %v195
    %v239 = vpop.f32.mrb[0].mxu0
    %v240 = vadd.f32 0.0, %v239
    %v241 = vpop.f32.mrb[0].mxu0
    %v242 = vpop.f32.mrb[0].mxu0
    %v243 = vadd.f32 0.0, %v242
    %v244 = vpop.f32.mrb[0].mxu0
    %245 = vdwg.mxu0
    %v246 = vpack.c.bf16 %v235, %v232
    %v247 = vpack.c.bf16 %v243, %v240
    %v248 = vld [vmem:[#allocation8] sm:$0xf]
    %v249 = vld [vmem:[#allocation8 + $0x4] sm:$0xf]
    %v250 = vld [vmem:[#allocation8 + $0x8] sm:$0xf]
    %v251 = vld [vmem:[#allocation8 + $0xc] sm:$0xf]
    %v252 = vld [vmem:[#allocation8 + $0x10] sm:$0xf]
    %v253 = vld [vmem:[#allocation8 + $0x14] sm:$0xf]
    %v254 = vld [vmem:[#allocation8 + $0x18] sm:$0xf]
    %v255 = vld [vmem:[#allocation8 + $0x1c] sm:$0xf]
    %v260 = vunpack.c.l.b16 %v144
    %v261 = vunpack.c.l.b16 %v145
    %v262 = vunpack.c.l.b16 %v146
    %v263 = vunpack.c.l.b16 %v147
    %v264 = vpack.c.b16 %v261, %v260
    %v265 = vpack.c.b16 %v263, %v262
    %v274 = vunpack.c.l.b16 %v248
    %v275 = vunpack.c.l.b16 %v249
    %v276 = vunpack.c.l.b16 %v250
    %v277 = vunpack.c.l.b16 %v251
    %v278 = vunpack.c.l.b16 %v252
    %v279 = vunpack.c.l.b16 %v253
    %v280 = vunpack.c.l.b16 %v254
    %v281 = vunpack.c.l.b16 %v255
    %v282 = vpack.c.b16 %v275, %v274
    %v283 = vpack.c.b16 %v277, %v276
    %v284 = vpack.c.b16 %v279, %v278
    %v285 = vpack.c.b16 %v281, %v280
    %v291 = vsel %vm190, %v264, 0
    %v294 = vsel %vm190, %v265, 0
    %296 = vmatprep.subr.bf16.mxu0 0
    %297 = vmatpush1.bf16.msra.mxu0 %v282
    %298 = vmatprep.subr.bf16.mxu0 0
    %299 = vmatpush1.bf16.msra.mxu0 %v283
    %300 = vmatprep.subr.bf16.mxu0 0
    %301 = vmatpush1.bf16.msra.mxu0 %v284
    %302 = vmatprep.subr.bf16.mxu0 0
    %303 = vmatpush1.bf16.msra.mxu0 %v285
    %304 = vmatprep.subr.bf16.mxu0 0
    %305 = vmatpush1.bf16.msra.mxu0 0
    %306 = vmatprep.subr.bf16.mxu0 0
    %307 = vmatpush1.bf16.msra.mxu0 0
    %308 = vmatprep.subr.bf16.mxu0 0
    %309 = vmatpush1.bf16.msra.mxu0 0
    %310 = vmatprep.subr.bf16.mxu0 0
    %311 = vmatpush1.bf16.msra.mxu0 0
    %312 = vmatprep.subr.bf16.mxu0 0
    %313 = vmatpush1.bf16.msra.mxu0 0
    %314 = vmatprep.subr.bf16.mxu0 0
    %315 = vmatpush1.bf16.msra.mxu0 0
    %316 = vmatprep.subr.bf16.mxu0 0
    %317 = vmatpush1.bf16.msra.mxu0 0
    %318 = vmatprep.subr.bf16.mxu0 0
    %319 = vmatpush1.bf16.msra.mxu0 0
    %320 = vmatprep.subr.bf16.mxu0 0
    %321 = vmatpush1.bf16.msra.mxu0 0
    %322 = vmatprep.subr.bf16.mxu0 0
    %323 = vmatpush1.bf16.msra.mxu0 0
    %324 = vmatprep.subr.bf16.mxu0 0
    %325 = vmatpush1.bf16.msra.mxu0 0
    %326 = vmatprep.subr.bf16.mxu0 0
    %327 = vmatpush1.bf16.msra.mxu0 0
    %328 = vmatprep.mubr.bf16.mxu0 0
    %329 = vmatmul.mubr.bf16.gmra.mrb[0].mxu0 %v291
    %v330 = vpop.f32.mrb[0].mxu0
    %v331 = vadd.f32 0.0, %v330
    %v332 = vpop.f32.mrb[0].mxu0
    %v333 = vpop.f32.mrb[0].mxu0
    %v334 = vadd.f32 0.0, %v333
    %v335 = vpop.f32.mrb[0].mxu0
    %336 = vmatprep.mubr.bf16.mxu0 0
    %337 = vmatmul.mubr.bf16.gmra.mrb[0].mxu0 %v294
    %v338 = vpop.f32.mrb[0].mxu0
    %v339 = vadd.f32 0.0, %v338
    %v340 = vpop.f32.mrb[0].mxu0
    %v341 = vpop.f32.mrb[0].mxu0
    %v342 = vadd.f32 0.0, %v341
    %v343 = vpop.f32.mrb[0].mxu0
    %344 = vdwg.mxu0
    %v345 = vpack.c.bf16 %v334, %v331
    %v346 = vpack.c.bf16 %v342, %v339
    %v347 = vld [vmem:[#allocation10] sm:$0xf]
    %v348 = vld [vmem:[#allocation10 + $0x4] sm:$0xf]
    %v349 = vld [vmem:[#allocation10 + $0x8] sm:$0xf]
    %v350 = vld [vmem:[#allocation10 + $0xc] sm:$0xf]
    %v351 = vld [vmem:[#allocation10 + $0x10] sm:$0xf]
    %v352 = vld [vmem:[#allocation10 + $0x14] sm:$0xf]
    %v353 = vld [vmem:[#allocation10 + $0x18] sm:$0xf]
    %v354 = vld [vmem:[#allocation10 + $0x1c] sm:$0xf]
    %v363 = vunpack.c.l.b16 %v347
    %v364 = vunpack.c.l.b16 %v348
    %v365 = vunpack.c.l.b16 %v349
    %v366 = vunpack.c.l.b16 %v350
    %v367 = vunpack.c.l.b16 %v351
    %v368 = vunpack.c.l.b16 %v352
    %v369 = vunpack.c.l.b16 %v353
    %v370 = vunpack.c.l.b16 %v354
    %v371 = vpack.c.b16 %v364, %v363
    %v372 = vpack.c.b16 %v366, %v365
    %v373 = vpack.c.b16 %v368, %v367
    %v374 = vpack.c.b16 %v370, %v369
    %379 = vmatprep.subr.bf16.mxu0 0
    %380 = vmatpush1.bf16.msra.mxu0 %v371
    %381 = vmatprep.subr.bf16.mxu0 0
    %382 = vmatpush1.bf16.msra.mxu0 %v372
    %383 = vmatprep.subr.bf16.mxu0 0
    %384 = vmatpush1.bf16.msra.mxu0 %v373
    %385 = vmatprep.subr.bf16.mxu0 0
    %386 = vmatpush1.bf16.msra.mxu0 %v374
    %387 = vmatprep.subr.bf16.mxu0 0
    %388 = vmatpush1.bf16.msra.mxu0 0
    %389 = vmatprep.subr.bf16.mxu0 0
    %390 = vmatpush1.bf16.msra.mxu0 0
    %391 = vmatprep.subr.bf16.mxu0 0
    %392 = vmatpush1.bf16.msra.mxu0 0
    %393 = vmatprep.subr.bf16.mxu0 0
    %394 = vmatpush1.bf16.msra.mxu0 0
    %395 = vmatprep.subr.bf16.mxu0 0
    %396 = vmatpush1.bf16.msra.mxu0 0
    %397 = vmatprep.subr.bf16.mxu0 0
    %398 = vmatpush1.bf16.msra.mxu0 0
    %399 = vmatprep.subr.bf16.mxu0 0
    %400 = vmatpush1.bf16.msra.mxu0 0
    %401 = vmatprep.subr.bf16.mxu0 0
    %402 = vmatpush1.bf16.msra.mxu0 0
    %403 = vmatprep.subr.bf16.mxu0 0
    %404 = vmatpush1.bf16.msra.mxu0 0
    %405 = vmatprep.subr.bf16.mxu0 0
    %406 = vmatpush1.bf16.msra.mxu0 0
    %407 = vmatprep.subr.bf16.mxu0 0
    %408 = vmatpush1.bf16.msra.mxu0 0
    %409 = vmatprep.subr.bf16.mxu0 0
    %410 = vmatpush1.bf16.msra.mxu0 0
    %411 = vmatprep.mubr.bf16.mxu0 0
    %412 = vmatmul.mubr.bf16.gmra.mrb[0].mxu0 %v291
    %v413 = vpop.f32.mrb[0].mxu0
    %v414 = vadd.f32 0.0, %v413
    %v415 = vpop.f32.mrb[0].mxu0
    %v416 = vpop.f32.mrb[0].mxu0
    %v417 = vadd.f32 0.0, %v416
    %v418 = vpop.f32.mrb[0].mxu0
    %419 = vmatprep.mubr.bf16.mxu0 0
    %420 = vmatmul.mubr.bf16.gmra.mrb[0].mxu0 %v294
    %v421 = vpop.f32.mrb[0].mxu0
    %v422 = vadd.f32 0.0, %v421
    %v423 = vpop.f32.mrb[0].mxu0
    %v424 = vpop.f32.mrb[0].mxu0
    %v425 = vadd.f32 0.0, %v424
    %v426 = vpop.f32.mrb[0].mxu0
    %427 = vdwg.mxu0
    %v428 = vpack.c.bf16 %v417, %v414
    %v429 = vpack.c.bf16 %v425, %v422
    %v430 = vld [vmem:[#allocation13] sm:$0xff]
    %v431 = vld [vmem:[#allocation13 + $0x8] sm:$0xff]
    %vm432 = vcmask 130048
    %v434 = vsel %vm432, %v246, 0
    %v437 = vsel %vm432, %v345, 0
    %439 = vmatprep.subr.bf16.mxu0 0
    %440 = vmatpush1.bf16.xpose.msra.mxu0 %v437
    %441 = vmatprep.subr.bf16.mxu0 0
    %442 = vmatpush1.bf16.xpose.msra.mxu0 0
    %443 = vmatprep.subr.bf16.mxu0 0
    %444 = vmatpush1.bf16.xpose.msra.mxu0 0
    %445 = vmatprep.subr.bf16.mxu0 0
    %446 = vmatpush1.bf16.xpose.msra.mxu0 0
    %447 = vmatprep.subr.bf16.mxu0 0
    %448 = vmatpush1.bf16.xpose.msra.mxu0 0
    %449 = vmatprep.subr.bf16.mxu0 0
    %450 = vmatpush1.bf16.xpose.msra.mxu0 0
    %451 = vmatprep.subr.bf16.mxu0 0
    %452 = vmatpush1.bf16.xpose.msra.mxu0 0
    %453 = vmatprep.subr.bf16.mxu0 0
    %454 = vmatpush1.bf16.xpose.msra.mxu0 0
    %455 = vmatprep.subr.bf16.mxu0 0
    %456 = vmatpush1.bf16.xpose.msra.mxu0 0
    %457 = vmatprep.subr.bf16.mxu0 0
    %458 = vmatpush1.bf16.xpose.msra.mxu0 0
    %459 = vmatprep.subr.bf16.mxu0 0
    %460 = vmatpush1.bf16.xpose.msra.mxu0 0
    %461 = vmatprep.subr.bf16.mxu0 0
    %462 = vmatpush1.bf16.xpose.msra.mxu0 0
    %463 = vmatprep.subr.bf16.mxu0 0
    %464 = vmatpush1.bf16.xpose.msra.mxu0 0
    %465 = vmatprep.subr.bf16.mxu0 0
    %466 = vmatpush1.bf16.xpose.msra.mxu0 0
    %467 = vmatprep.subr.bf16.mxu0 0
    %468 = vmatpush1.bf16.xpose.msra.mxu0 0
    %469 = vmatprep.subr.bf16.mxu0 0
    %470 = vmatpush1.bf16.xpose.msra.mxu0 0
    %471 = vmatprep.mubr.bf16.mxu0 0
    %472 = vmatmul.mubr.bf16.gmra.mrb[0].mxu0 %v434
    %v473 = vpop.f32.mrb[0].mxu0
    %v474 = vadd.f32 %v430, %v473
    %v475 = vpop.f32.mrb[0].mxu0
    %v476 = vpop.f32.mrb[0].mxu0
    %v477 = vadd.f32 %v431, %v476
    %v478 = vpop.f32.mrb[0].mxu0
    %479 = vdwg.mxu0
    %v480 = vld [vmem:[#allocation14] sm:$0xff]
    %v481 = vld [vmem:[#allocation14 + $0x8] sm:$0xff]
    %v482 = vadd.f32 %v474, %v480
    %v483 = vadd.f32 %v477, %v481
    %v484 = vsel %vm432, %v482, -inf
    %485 = vmax.xlane.f32.xlu0 %v484
    %v486 = vpop.xlane.xlu0 %485
    %v487 = vsel %vm432, %v483, -inf
    %488 = vmax.xlane.f32.xlu0 %v487
    %v489 = vpop.xlane.xlu0 %488
    %v490 = vsub.f32 %v482, %v486
    %v491 = vsub.f32 %v483, %v489
    %v492 = vmul.f32 %v490, 1.442695
    %v493 = vpow.pop %v492
    %v494 = vmul.f32 %v491, 1.442695
    %v495 = vpow.pop %v494
    %v496 = vsel %vm432, %v493, 0.0
    %497 = vadd.xlane.f32.xlu0 %v496
    %v498 = vpop.xlane.xlu0 %497
    %v499 = vsel %vm432, %v495, 0.0
    %500 = vadd.xlane.f32.xlu0 %v499
    %v501 = vpop.xlane.xlu0 %500
    %v502 = vrcp.pop %v498
    %v503 = vmul.f32 %v493, %v502
    %v504 = vrcp.pop %v501
    %v505 = vmul.f32 %v495, %v504
    %v506 = vpack.c.bf16 %v505, %v503
    %v508 = vsel %vm432, %v506, 0
    %510 = vmatprep.subr.bf16.mxu0 0
    %511 = vmatpush1.bf16.msra.mxu0 %v428
    %512 = vmatprep.subr.bf16.mxu0 0
    %513 = vmatpush1.bf16.msra.mxu0 0
    %514 = vmatprep.subr.bf16.mxu0 0
    %515 = vmatpush1.bf16.msra.mxu0 0
    %516 = vmatprep.subr.bf16.mxu0 0
    %517 = vmatpush1.bf16.msra.mxu0 0
    %518 = vmatprep.subr.bf16.mxu0 0
    %519 = vmatpush1.bf16.msra.mxu0 0
    %520 = vmatprep.subr.bf16.mxu0 0
    %521 = vmatpush1.bf16.msra.mxu0 0
    %522 = vmatprep.subr.bf16.mxu0 0
    %523 = vmatpush1.bf16.msra.mxu0 0
    %524 = vmatprep.subr.bf16.mxu0 0
    %525 = vmatpush1.bf16.msra.mxu0 0
    %526 = vmatprep.subr.bf16.mxu0 0
    %527 = vmatpush1.bf16.msra.mxu0 0
    %528 = vmatprep.subr.bf16.mxu0 0
    %529 = vmatpush1.bf16.msra.mxu0 0
    %530 = vmatprep.subr.bf16.mxu0 0
    %531 = vmatpush1.bf16.msra.mxu0 0
    %532 = vmatprep.subr.bf16.mxu0 0
    %533 = vmatpush1.bf16.msra.mxu0 0
    %534 = vmatprep.subr.bf16.mxu0 0
    %535 = vmatpush1.bf16.msra.mxu0 0
    %536 = vmatprep.subr.bf16.mxu0 0
    %537 = vmatpush1.bf16.msra.mxu0 0
    %538 = vmatprep.subr.bf16.mxu0 0
    %539 = vmatpush1.bf16.msra.mxu0 0
    %540 = vmatprep.subr.bf16.mxu0 0
    %541 = vmatpush1.bf16.msra.mxu0 0
    %542 = vmatprep.mubr.bf16.mxu0 0
    %543 = vmatmul.mubr.bf16.gmra.mrb[0].mxu0 %v508
    %v544 = vpop.f32.mrb[0].mxu0
    %v545 = vadd.f32 0.0, %v544
    %v546 = vpop.f32.mrb[0].mxu0
    %v547 = vpop.f32.mrb[0].mxu0
    %v548 = vadd.f32 0.0, %v547
    %v549 = vpop.f32.mrb[0].mxu0
    %550 = vdwg.mxu0
    %s551 = scalar_lea.vmem [#allocation13], 16
    %v552 = vld [vmem:[%s551] sm:$0xff]
    %v553 = vld [vmem:[%s551 + $0x8] sm:$0xff]
    %555 = vrot.lane.b32.xlu0 %v246, 112
    %v556 = vpop.permute.xlu0 %555
    %558 = vrot.lane.b32.xlu0 %v345, 112
    %v559 = vpop.permute.xlu0 %558
    %v561 = vsel %vm432, %v556, 0
    %v564 = vsel %vm432, %v559, 0
    %566 = vmatprep.subr.bf16.mxu0 0
    %567 = vmatpush1.bf16.xpose.msra.mxu0 %v564
    %568 = vmatprep.subr.bf16.mxu0 0
    %569 = vmatpush1.bf16.xpose.msra.mxu0 0
    %570 = vmatprep.subr.bf16.mxu0 0
    %571 = vmatpush1.bf16.xpose.msra.mxu0 0
    %572 = vmatprep.subr.bf16.mxu0 0
    %573 = vmatpush1.bf16.xpose.msra.mxu0 0
    %574 = vmatprep.subr.bf16.mxu0 0
    %575 = vmatpush1.bf16.xpose.msra.mxu0 0
    %576 = vmatprep.subr.bf16.mxu0 0
    %577 = vmatpush1.bf16.xpose.msra.mxu0 0
    %578 = vmatprep.subr.bf16.mxu0 0
    %579 = vmatpush1.bf16.xpose.msra.mxu0 0
    %580 = vmatprep.subr.bf16.mxu0 0
    %581 = vmatpush1.bf16.xpose.msra.mxu0 0
    %582 = vmatprep.subr.bf16.mxu0 0
    %583 = vmatpush1.bf16.xpose.msra.mxu0 0
    %584 = vmatprep.subr.bf16.mxu0 0
    %585 = vmatpush1.bf16.xpose.msra.mxu0 0
    %586 = vmatprep.subr.bf16.mxu0 0
    %587 = vmatpush1.bf16.xpose.msra.mxu0 0
    %588 = vmatprep.subr.bf16.mxu0 0
    %589 = vmatpush1.bf16.xpose.msra.mxu0 0
    %590 = vmatprep.subr.bf16.mxu0 0
    %591 = vmatpush1.bf16.xpose.msra.mxu0 0
    %592 = vmatprep.subr.bf16.mxu0 0
    %593 = vmatpush1.bf16.xpose.msra.mxu0 0
    %594 = vmatprep.subr.bf16.mxu0 0
    %595 = vmatpush1.bf16.xpose.msra.mxu0 0
    %596 = vmatprep.subr.bf16.mxu0 0
    %597 = vmatpush1.bf16.xpose.msra.mxu0 0
    %598 = vmatprep.mubr.bf16.mxu0 0
    %599 = vmatmul.mubr.bf16.gmra.mrb[0].mxu0 %v561
    %v600 = vpop.f32.mrb[0].mxu0
    %v601 = vadd.f32 %v552, %v600
    %v602 = vpop.f32.mrb[0].mxu0
    %v603 = vpop.f32.mrb[0].mxu0
    %v604 = vadd.f32 %v553, %v603
    %v605 = vpop.f32.mrb[0].mxu0
    %606 = vdwg.mxu0
    %v607 = vadd.f32 %v601, %v480
    %v608 = vadd.f32 %v604, %v481
    %v609 = vsel %vm432, %v607, -inf
    %610 = vmax.xlane.f32.xlu0 %v609
    %v611 = vpop.xlane.xlu0 %610
    %v612 = vsel %vm432, %v608, -inf
    %613 = vmax.xlane.f32.xlu0 %v612
    %v614 = vpop.xlane.xlu0 %613
    %v615 = vsub.f32 %v607, %v611
    %v616 = vsub.f32 %v608, %v614
    %v617 = vmul.f32 %v615, 1.442695
    %v618 = vpow.pop %v617
    %v619 = vmul.f32 %v616, 1.442695
    %v620 = vpow.pop %v619
    %v621 = vsel %vm432, %v618, 0.0
    %622 = vadd.xlane.f32.xlu0 %v621
    %v623 = vpop.xlane.xlu0 %622
    %v624 = vsel %vm432, %v620, 0.0
    %625 = vadd.xlane.f32.xlu0 %v624
    %v626 = vpop.xlane.xlu0 %625
    %v627 = vrcp.pop %v623
    %v628 = vmul.f32 %v618, %v627
    %v629 = vrcp.pop %v626
    %v630 = vmul.f32 %v620, %v629
    %v631 = vpack.c.bf16 %v630, %v628
    %633 = vrot.lane.b32.xlu0 %v428, 112
    %v634 = vpop.permute.xlu0 %633
    %v637 = vsel %vm432, %v631, 0
    %639 = vmatprep.subr.bf16.mxu0 0
    %640 = vmatpush1.bf16.msra.mxu0 %v634
    %641 = vmatprep.subr.bf16.mxu0 0
    %642 = vmatpush1.bf16.msra.mxu0 0
    %643 = vmatprep.subr.bf16.mxu0 0
    %644 = vmatpush1.bf16.msra.mxu0 0
    %645 = vmatprep.subr.bf16.mxu0 0
    %646 = vmatpush1.bf16.msra.mxu0 0
    %647 = vmatprep.subr.bf16.mxu0 0
    %648 = vmatpush1.bf16.msra.mxu0 0
    %649 = vmatprep.subr.bf16.mxu0 0
    %650 = vmatpush1.bf16.msra.mxu0 0
    %651 = vmatprep.subr.bf16.mxu0 0
    %652 = vmatpush1.bf16.msra.mxu0 0
    %653 = vmatprep.subr.bf16.mxu0 0
    %654 = vmatpush1.bf16.msra.mxu0 0
    %655 = vmatprep.subr.bf16.mxu0 0
    %656 = vmatpush1.bf16.msra.mxu0 0
    %657 = vmatprep.subr.bf16.mxu0 0
    %658 = vmatpush1.bf16.msra.mxu0 0
    %659 = vmatprep.subr.bf16.mxu0 0
    %660 = vmatpush1.bf16.msra.mxu0 0
    %661 = vmatprep.subr.bf16.mxu0 0
    %662 = vmatpush1.bf16.msra.mxu0 0
    %663 = vmatprep.subr.bf16.mxu0 0
    %664 = vmatpush1.bf16.msra.mxu0 0
    %665 = vmatprep.subr.bf16.mxu0 0
    %666 = vmatpush1.bf16.msra.mxu0 0
    %667 = vmatprep.subr.bf16.mxu0 0
    %668 = vmatpush1.bf16.msra.mxu0 0
    %669 = vmatprep.subr.bf16.mxu0 0
    %670 = vmatpush1.bf16.msra.mxu0 0
    %671 = vmatprep.mubr.bf16.mxu0 0
    %672 = vmatmul.mubr.bf16.gmra.mrb[0].mxu0 %v637
    %v673 = vpop.f32.mrb[0].mxu0
    %v674 = vadd.f32 0.0, %v673
    %v675 = vpop.f32.mrb[0].mxu0
    %v676 = vpop.f32.mrb[0].mxu0
    %v677 = vadd.f32 0.0, %v676
    %v678 = vpop.f32.mrb[0].mxu0
    %679 = vdwg.mxu0
    %s680 = scalar_lea.vmem [#allocation13], 32
    %v681 = vld [vmem:[%s680] sm:$0xff]
    %v682 = vld [vmem:[%s680 + $0x8] sm:$0xff]
    %683 = vrot.lane.b32.xlu0 %v246, 96
    %v684 = vpop.permute.xlu0 %683
    %685 = vrot.lane.b32.xlu0 %v345, 96
    %v686 = vpop.permute.xlu0 %685
    %v688 = vsel %vm432, %v684, 0
    %v691 = vsel %vm432, %v686, 0
    %693 = vmatprep.subr.bf16.mxu0 0
    %694 = vmatpush1.bf16.xpose.msra.mxu0 %v691
    %695 = vmatprep.subr.bf16.mxu0 0
    %696 = vmatpush1.bf16.xpose.msra.mxu0 0
    %697 = vmatprep.subr.bf16.mxu0 0
    %698 = vmatpush1.bf16.xpose.msra.mxu0 0
    %699 = vmatprep.subr.bf16.mxu0 0
    %700 = vmatpush1.bf16.xpose.msra.mxu0 0
    %701 = vmatprep.subr.bf16.mxu0 0
    %702 = vmatpush1.bf16.xpose.msra.mxu0 0
    %703 = vmatprep.subr.bf16.mxu0 0
    %704 = vmatpush1.bf16.xpose.msra.mxu0 0
    %705 = vmatprep.subr.bf16.mxu0 0
    %706 = vmatpush1.bf16.xpose.msra.mxu0 0
    %707 = vmatprep.subr.bf16.mxu0 0
    %708 = vmatpush1.bf16.xpose.msra.mxu0 0
    %709 = vmatprep.subr.bf16.mxu0 0
    %710 = vmatpush1.bf16.xpose.msra.mxu0 0
    %711 = vmatprep.subr.bf16.mxu0 0
    %712 = vmatpush1.bf16.xpose.msra.mxu0 0
    %713 = vmatprep.subr.bf16.mxu0 0
    %714 = vmatpush1.bf16.xpose.msra.mxu0 0
    %715 = vmatprep.subr.bf16.mxu0 0
    %716 = vmatpush1.bf16.xpose.msra.mxu0 0
    %717 = vmatprep.subr.bf16.mxu0 0
    %718 = vmatpush1.bf16.xpose.msra.mxu0 0
    %719 = vmatprep.subr.bf16.mxu0 0
    %720 = vmatpush1.bf16.xpose.msra.mxu0 0
    %721 = vmatprep.subr.bf16.mxu0 0
    %722 = vmatpush1.bf16.xpose.msra.mxu0 0
    %723 = vmatprep.subr.bf16.mxu0 0
    %724 = vmatpush1.bf16.xpose.msra.mxu0 0
    %725 = vmatprep.mubr.bf16.mxu0 0
    %726 = vmatmul.mubr.bf16.gmra.mrb[0].mxu0 %v688
    %v727 = vpop.f32.mrb[0].mxu0
    %v728 = vadd.f32 %v681, %v727
    %v729 = vpop.f32.mrb[0].mxu0
    %v730 = vpop.f32.mrb[0].mxu0
    %v731 = vadd.f32 %v682, %v730
    %v732 = vpop.f32.mrb[0].mxu0
    %733 = vdwg.mxu0
    %v734 = vadd.f32 %v728, %v480
    %v735 = vadd.f32 %v731, %v481
    %v736 = vsel %vm432, %v734, -inf
    %737 = vmax.xlane.f32.xlu0 %v736
    %v738 = vpop.xlane.xlu0 %737
    %v739 = vsel %vm432, %v735, -inf
    %740 = vmax.xlane.f32.xlu0 %v739
    %v741 = vpop.xlane.xlu0 %740
    %v742 = vsub.f32 %v734, %v738
    %v743 = vsub.f32 %v735, %v741
    %v744 = vmul.f32 %v742, 1.442695
    %v745 = vpow.pop %v744
    %v746 = vmul.f32 %v743, 1.442695
    %v747 = vpow.pop %v746
    %v748 = vsel %vm432, %v745, 0.0
    %749 = vadd.xlane.f32.xlu0 %v748
    %v750 = vpop.xlane.xlu0 %749
    %v751 = vsel %vm432, %v747, 0.0
    %752 = vadd.xlane.f32.xlu0 %v751
    %v753 = vpop.xlane.xlu0 %752
    %v754 = vrcp.pop %v750
    %v755 = vmul.f32 %v745, %v754
    %v756 = vrcp.pop %v753
    %v757 = vmul.f32 %v747, %v756
    %v758 = vpack.c.bf16 %v757, %v755
    %759 = vrot.lane.b32.xlu0 %v428, 96
    %v760 = vpop.permute.xlu0 %759
    %v763 = vsel %vm432, %v758, 0
    %765 = vmatprep.subr.bf16.mxu0 0
    %766 = vmatpush1.bf16.msra.mxu0 %v760
    %767 = vmatprep.subr.bf16.mxu0 0
    %768 = vmatpush1.bf16.msra.mxu0 0
    %769 = vmatprep.subr.bf16.mxu0 0
    %770 = vmatpush1.bf16.msra.mxu0 0
    %771 = vmatprep.subr.bf16.mxu0 0
    %772 = vmatpush1.bf16.msra.mxu0 0
    %773 = vmatprep.subr.bf16.mxu0 0
    %774 = vmatpush1.bf16.msra.mxu0 0
    %775 = vmatprep.subr.bf16.mxu0 0
    %776 = vmatpush1.bf16.msra.mxu0 0
    %777 = vmatprep.subr.bf16.mxu0 0
    %778 = vmatpush1.bf16.msra.mxu0 0
    %779 = vmatprep.subr.bf16.mxu0 0
    %780 = vmatpush1.bf16.msra.mxu0 0
    %781 = vmatprep.subr.bf16.mxu0 0
    %782 = vmatpush1.bf16.msra.mxu0 0
    %783 = vmatprep.subr.bf16.mxu0 0
    %784 = vmatpush1.bf16.msra.mxu0 0
    %785 = vmatprep.subr.bf16.mxu0 0
    %786 = vmatpush1.bf16.msra.mxu0 0
    %787 = vmatprep.subr.bf16.mxu0 0
    %788 = vmatpush1.bf16.msra.mxu0 0
    %789 = vmatprep.subr.bf16.mxu0 0
    %790 = vmatpush1.bf16.msra.mxu0 0
    %791 = vmatprep.subr.bf16.mxu0 0
    %792 = vmatpush1.bf16.msra.mxu0 0
    %793 = vmatprep.subr.bf16.mxu0 0
    %794 = vmatpush1.bf16.msra.mxu0 0
    %795 = vmatprep.subr.bf16.mxu0 0
    %796 = vmatpush1.bf16.msra.mxu0 0
    %797 = vmatprep.mubr.bf16.mxu0 0
    %798 = vmatmul.mubr.bf16.gmra.mrb[0].mxu0 %v763
    %v799 = vpop.f32.mrb[0].mxu0
    %v800 = vadd.f32 0.0, %v799
    %v801 = vpop.f32.mrb[0].mxu0
    %v802 = vpop.f32.mrb[0].mxu0
    %v803 = vadd.f32 0.0, %v802
    %v804 = vpop.f32.mrb[0].mxu0
    %805 = vdwg.mxu0
    %s806 = scalar_lea.vmem [#allocation13], 48
    %v807 = vld [vmem:[%s806] sm:$0xff]
    %v808 = vld [vmem:[%s806 + $0x8] sm:$0xff]
    %809 = vrot.lane.b32.xlu0 %v246, 80
    %v810 = vpop.permute.xlu0 %809
    %811 = vrot.lane.b32.xlu0 %v345, 80
    %v812 = vpop.permute.xlu0 %811
    %v814 = vsel %vm432, %v810, 0
    %v817 = vsel %vm432, %v812, 0
    %819 = vmatprep.subr.bf16.mxu0 0
    %820 = vmatpush1.bf16.xpose.msra.mxu0 %v817
    %821 = vmatprep.subr.bf16.mxu0 0
    %822 = vmatpush1.bf16.xpose.msra.mxu0 0
    %823 = vmatprep.subr.bf16.mxu0 0
    %824 = vmatpush1.bf16.xpose.msra.mxu0 0
    %825 = vmatprep.subr.bf16.mxu0 0
    %826 = vmatpush1.bf16.xpose.msra.mxu0 0
    %827 = vmatprep.subr.bf16.mxu0 0
    %828 = vmatpush1.bf16.xpose.msra.mxu0 0
    %829 = vmatprep.subr.bf16.mxu0 0
    %830 = vmatpush1.bf16.xpose.msra.mxu0 0
    %831 = vmatprep.subr.bf16.mxu0 0
    %832 = vmatpush1.bf16.xpose.msra.mxu0 0
    %833 = vmatprep.subr.bf16.mxu0 0
    %834 = vmatpush1.bf16.xpose.msra.mxu0 0
    %835 = vmatprep.subr.bf16.mxu0 0
    %836 = vmatpush1.bf16.xpose.msra.mxu0 0
    %837 = vmatprep.subr.bf16.mxu0 0
    %838 = vmatpush1.bf16.xpose.msra.mxu0 0
    %839 = vmatprep.subr.bf16.mxu0 0
    %840 = vmatpush1.bf16.xpose.msra.mxu0 0
    %841 = vmatprep.subr.bf16.mxu0 0
    %842 = vmatpush1.bf16.xpose.msra.mxu0 0
    %843 = vmatprep.subr.bf16.mxu0 0
    %844 = vmatpush1.bf16.xpose.msra.mxu0 0
    %845 = vmatprep.subr.bf16.mxu0 0
    %846 = vmatpush1.bf16.xpose.msra.mxu0 0
    %847 = vmatprep.subr.bf16.mxu0 0
    %848 = vmatpush1.bf16.xpose.msra.mxu0 0
    %849 = vmatprep.subr.bf16.mxu0 0
    %850 = vmatpush1.bf16.xpose.msra.mxu0 0
    %851 = vmatprep.mubr.bf16.mxu0 0
    %852 = vmatmul.mubr.bf16.gmra.mrb[0].mxu0 %v814
    %v853 = vpop.f32.mrb[0].mxu0
    %v854 = vadd.f32 %v807, %v853
    %v855 = vpop.f32.mrb[0].mxu0
    %v856 = vpop.f32.mrb[0].mxu0
    %v857 = vadd.f32 %v808, %v856
    %v858 = vpop.f32.mrb[0].mxu0
    %859 = vdwg.mxu0
    %v860 = vadd.f32 %v854, %v480
    %v861 = vadd.f32 %v857, %v481
    %v862 = vsel %vm432, %v860, -inf
    %863 = vmax.xlane.f32.xlu0 %v862
    %v864 = vpop.xlane.xlu0 %863
    %v865 = vsel %vm432, %v861, -inf
    %866 = vmax.xlane.f32.xlu0 %v865
    %v867 = vpop.xlane.xlu0 %866
    %v868 = vsub.f32 %v860, %v864
    %v869 = vsub.f32 %v861, %v867
    %v870 = vmul.f32 %v868, 1.442695
    %v871 = vpow.pop %v870
    %v872 = vmul.f32 %v869, 1.442695
    %v873 = vpow.pop %v872
    %v874 = vsel %vm432, %v871, 0.0
    %875 = vadd.xlane.f32.xlu0 %v874
    %v876 = vpop.xlane.xlu0 %875
    %v877 = vsel %vm432, %v873, 0.0
    %878 = vadd.xlane.f32.xlu0 %v877
    %v879 = vpop.xlane.xlu0 %878
    %v880 = vrcp.pop %v876
    %v881 = vmul.f32 %v871, %v880
    %v882 = vrcp.pop %v879
    %v883 = vmul.f32 %v873, %v882
    %v884 = vpack.c.bf16 %v883, %v881
    %885 = vrot.lane.b32.xlu0 %v428, 80
    %v886 = vpop.permute.xlu0 %885
    %v889 = vsel %vm432, %v884, 0
    %891 = vmatprep.subr.bf16.mxu0 0
    %892 = vmatpush1.bf16.msra.mxu0 %v886
    %893 = vmatprep.subr.bf16.mxu0 0
    %894 = vmatpush1.bf16.msra.mxu0 0
    %895 = vmatprep.subr.bf16.mxu0 0
    %896 = vmatpush1.bf16.msra.mxu0 0
    %897 = vmatprep.subr.bf16.mxu0 0
    %898 = vmatpush1.bf16.msra.mxu0 0
    %899 = vmatprep.subr.bf16.mxu0 0
    %900 = vmatpush1.bf16.msra.mxu0 0
    %901 = vmatprep.subr.bf16.mxu0 0
    %902 = vmatpush1.bf16.msra.mxu0 0
    %903 = vmatprep.subr.bf16.mxu0 0
    %904 = vmatpush1.bf16.msra.mxu0 0
    %905 = vmatprep.subr.bf16.mxu0 0
    %906 = vmatpush1.bf16.msra.mxu0 0
    %907 = vmatprep.subr.bf16.mxu0 0
    %908 = vmatpush1.bf16.msra.mxu0 0
    %909 = vmatprep.subr.bf16.mxu0 0
    %910 = vmatpush1.bf16.msra.mxu0 0
    %911 = vmatprep.subr.bf16.mxu0 0
    %912 = vmatpush1.bf16.msra.mxu0 0
    %913 = vmatprep.subr.bf16.mxu0 0
    %914 = vmatpush1.bf16.msra.mxu0 0
    %915 = vmatprep.subr.bf16.mxu0 0
    %916 = vmatpush1.bf16.msra.mxu0 0
    %917 = vmatprep.subr.bf16.mxu0 0
    %918 = vmatpush1.bf16.msra.mxu0 0
    %919 = vmatprep.subr.bf16.mxu0 0
    %920 = vmatpush1.bf16.msra.mxu0 0
    %921 = vmatprep.subr.bf16.mxu0 0
    %922 = vmatpush1.bf16.msra.mxu0 0
    %923 = vmatprep.mubr.bf16.mxu0 0
    %924 = vmatmul.mubr.bf16.gmra.mrb[0].mxu0 %v889
    %v925 = vpop.f32.mrb[0].mxu0
    %v926 = vadd.f32 0.0, %v925
    %v927 = vpop.f32.mrb[0].mxu0
    %v928 = vpop.f32.mrb[0].mxu0
    %v929 = vadd.f32 0.0, %v928
    %v930 = vpop.f32.mrb[0].mxu0
    %931 = vdwg.mxu0
    %934 = vrot.lane.b32.xlu0 %v674, 16
    %v935 = vpop.permute.xlu0 %934
    %936 = vrot.lane.b32.xlu0 %v677, 16
    %v937 = vpop.permute.xlu0 %936
    %942 = vrot.lane.b32.xlu0 %v800, 32
    %v943 = vpop.permute.xlu0 %942
    %944 = vrot.lane.b32.xlu0 %v803, 32
    %v945 = vpop.permute.xlu0 %944
    %950 = vrot.lane.b32.xlu0 %v926, 48
    %v951 = vpop.permute.xlu0 %950
    %952 = vrot.lane.b32.xlu0 %v929, 48
    %v953 = vpop.permute.xlu0 %952
    %v956 = vsel %vm432, %v545, %v935
    %v957 = vsel %vm432, %v548, %v937
    %vm958 = vcmask 261120
    %v959 = vsel %vm958, %v956, %v943
    %v960 = vsel %vm958, %v957, %v945
    %vm961 = vcmask 392192
    %v962 = vsel %vm961, %v959, %v951
    %v963 = vsel %vm961, %v960, %v953
    %v965 = vsel %vm432, %v247, 0
    %v968 = vsel %vm432, %v346, 0
    %970 = vmatprep.subr.bf16.mxu0 0
    %971 = vmatpush1.bf16.xpose.msra.mxu0 %v968
    %972 = vmatprep.subr.bf16.mxu0 0
    %973 = vmatpush1.bf16.xpose.msra.mxu0 0
    %974 = vmatprep.subr.bf16.mxu0 0
    %975 = vmatpush1.bf16.xpose.msra.mxu0 0
    %976 = vmatprep.subr.bf16.mxu0 0
    %977 = vmatpush1.bf16.xpose.msra.mxu0 0
    %978 = vmatprep.subr.bf16.mxu0 0
    %979 = vmatpush1.bf16.xpose.msra.mxu0 0
    %980 = vmatprep.subr.bf16.mxu0 0
    %981 = vmatpush1.bf16.xpose.msra.mxu0 0
    %982 = vmatprep.subr.bf16.mxu0 0
    %983 = vmatpush1.bf16.xpose.msra.mxu0 0
    %984 = vmatprep.subr.bf16.mxu0 0
    %985 = vmatpush1.bf16.xpose.msra.mxu0 0
    %986 = vmatprep.subr.bf16.mxu0 0
    %987 = vmatpush1.bf16.xpose.msra.mxu0 0
    %988 = vmatprep.subr.bf16.mxu0 0
    %989 = vmatpush1.bf16.xpose.msra.mxu0 0
    %990 = vmatprep.subr.bf16.mxu0 0
    %991 = vmatpush1.bf16.xpose.msra.mxu0 0
    %992 = vmatprep.subr.bf16.mxu0 0
    %993 = vmatpush1.bf16.xpose.msra.mxu0 0
    %994 = vmatprep.subr.bf16.mxu0 0
    %995 = vmatpush1.bf16.xpose.msra.mxu0 0
    %996 = vmatprep.subr.bf16.mxu0 0
    %997 = vmatpush1.bf16.xpose.msra.mxu0 0
    %998 = vmatprep.subr.bf16.mxu0 0
    %999 = vmatpush1.bf16.xpose.msra.mxu0 0
    %1000 = vmatprep.subr.bf16.mxu0 0
    %1001 = vmatpush1.bf16.xpose.msra.mxu0 0
    %1002 = vmatprep.mubr.bf16.mxu0 0
    %1003 = vmatmul.mubr.bf16.gmra.mrb[0].mxu0 %v965
    %v1004 = vpop.f32.mrb[0].mxu0
    %v1005 = vadd.f32 %v430, %v1004
    %v1006 = vpop.f32.mrb[0].mxu0
    %v1007 = vpop.f32.mrb[0].mxu0
    %v1008 = vadd.f32 %v431, %v1007
    %v1009 = vpop.f32.mrb[0].mxu0
    %1010 = vdwg.mxu0
    %s1011 = scalar_lea.vmem [#allocation14], 16
    %v1012 = vld [vmem:[%s1011] sm:$0xff]
    %v1013 = vld [vmem:[%s1011 + $0x8] sm:$0xff]
    %v1014 = vadd.f32 %v1005, %v1012
    %v1015 = vadd.f32 %v1008, %v1013
    %v1016 = vsel %vm432, %v1014, -inf
    %1017 = vmax.xlane.f32.xlu0 %v1016
    %v1018 = vpop.xlane.xlu0 %1017
    %v1019 = vsel %vm432, %v1015, -inf
    %1020 = vmax.xlane.f32.xlu0 %v1019
    %v1021 = vpop.xlane.xlu0 %1020
    %v1022 = vsub.f32 %v1014, %v1018
    %v1023 = vsub.f32 %v1015, %v1021
    %v1024 = vmul.f32 %v1022, 1.442695
    %v1025 = vpow.pop %v1024
    %v1026 = vmul.f32 %v1023, 1.442695
    %v1027 = vpow.pop %v1026
    %v1028 = vsel %vm432, %v1025, 0.0
    %1029 = vadd.xlane.f32.xlu0 %v1028
    %v1030 = vpop.xlane.xlu0 %1029
    %v1031 = vsel %vm432, %v1027, 0.0
    %1032 = vadd.xlane.f32.xlu0 %v1031
    %v1033 = vpop.xlane.xlu0 %1032
    %v1034 = vrcp.pop %v1030
    %v1035 = vmul.f32 %v1025, %v1034
    %v1036 = vrcp.pop %v1033
    %v1037 = vmul.f32 %v1027, %v1036
    %v1038 = vpack.c.bf16 %v1037, %v1035
    %v1040 = vsel %vm432, %v1038, 0
    %1042 = vmatprep.subr.bf16.mxu0 0
    %1043 = vmatpush1.bf16.msra.mxu0 %v429
    %1044 = vmatprep.subr.bf16.mxu0 0
    %1045 = vmatpush1.bf16.msra.mxu0 0
    %1046 = vmatprep.subr.bf16.mxu0 0
    %1047 = vmatpush1.bf16.msra.mxu0 0
    %1048 = vmatprep.subr.bf16.mxu0 0
    %1049 = vmatpush1.bf16.msra.mxu0 0
    %1050 = vmatprep.subr.bf16.mxu0 0
    %1051 = vmatpush1.bf16.msra.mxu0 0
    %1052 = vmatprep.subr.bf16.mxu0 0
    %1053 = vmatpush1.bf16.msra.mxu0 0
    %1054 = vmatprep.subr.bf16.mxu0 0
    %1055 = vmatpush1.bf16.msra.mxu0 0
    %1056 = vmatprep.subr.bf16.mxu0 0
    %1057 = vmatpush1.bf16.msra.mxu0 0
    %1058 = vmatprep.subr.bf16.mxu0 0
    %1059 = vmatpush1.bf16.msra.mxu0 0
    %1060 = vmatprep.subr.bf16.mxu0 0
    %1061 = vmatpush1.bf16.msra.mxu0 0
    %1062 = vmatprep.subr.bf16.mxu0 0
    %1063 = vmatpush1.bf16.msra.mxu0 0
    %1064 = vmatprep.subr.bf16.mxu0 0
    %1065 = vmatpush1.bf16.msra.mxu0 0
    %1066 = vmatprep.subr.bf16.mxu0 0
    %1067 = vmatpush1.bf16.msra.mxu0 0
    %1068 = vmatprep.subr.bf16.mxu0 0
    %1069 = vmatpush1.bf16.msra.mxu0 0
    %1070 = vmatprep.subr.bf16.mxu0 0
    %1071 = vmatpush1.bf16.msra.mxu0 0
    %1072 = vmatprep.subr.bf16.mxu0 0
    %1073 = vmatpush1.bf16.msra.mxu0 0
    %1074 = vmatprep.mubr.bf16.mxu0 0
    %1075 = vmatmul.mubr.bf16.gmra.mrb[0].mxu0 %v1040
    %v1076 = vpop.f32.mrb[0].mxu0
    %v1077 = vadd.f32 0.0, %v1076
    %v1078 = vpop.f32.mrb[0].mxu0
    %v1079 = vpop.f32.mrb[0].mxu0
    %v1080 = vadd.f32 0.0, %v1079
    %v1081 = vpop.f32.mrb[0].mxu0
    %1082 = vdwg.mxu0
    %1084 = vrot.lane.b32.xlu0 %v247, 112
    %v1085 = vpop.permute.xlu0 %1084
    %1087 = vrot.lane.b32.xlu0 %v346, 112
    %v1088 = vpop.permute.xlu0 %1087
    %v1090 = vsel %vm432, %v1085, 0
    %v1093 = vsel %vm432, %v1088, 0
    %1095 = vmatprep.subr.bf16.mxu0 0
    %1096 = vmatpush1.bf16.xpose.msra.mxu0 %v1093
    %1097 = vmatprep.subr.bf16.mxu0 0
    %1098 = vmatpush1.bf16.xpose.msra.mxu0 0
    %1099 = vmatprep.subr.bf16.mxu0 0
    %1100 = vmatpush1.bf16.xpose.msra.mxu0 0
    %1101 = vmatprep.subr.bf16.mxu0 0
    %1102 = vmatpush1.bf16.xpose.msra.mxu0 0
    %1103 = vmatprep.subr.bf16.mxu0 0
    %1104 = vmatpush1.bf16.xpose.msra.mxu0 0
    %1105 = vmatprep.subr.bf16.mxu0 0
    %1106 = vmatpush1.bf16.xpose.msra.mxu0 0
    %1107 = vmatprep.subr.bf16.mxu0 0
    %1108 = vmatpush1.bf16.xpose.msra.mxu0 0
    %1109 = vmatprep.subr.bf16.mxu0 0
    %1110 = vmatpush1.bf16.xpose.msra.mxu0 0
    %1111 = vmatprep.subr.bf16.mxu0 0
    %1112 = vmatpush1.bf16.xpose.msra.mxu0 0
    %1113 = vmatprep.subr.bf16.mxu0 0
    %1114 = vmatpush1.bf16.xpose.msra.mxu0 0
    %1115 = vmatprep.subr.bf16.mxu0 0
    %1116 = vmatpush1.bf16.xpose.msra.mxu0 0
    %1117 = vmatprep.subr.bf16.mxu0 0
    %1118 = vmatpush1.bf16.xpose.msra.mxu0 0
    %1119 = vmatprep.subr.bf16.mxu0 0
    %1120 = vmatpush1.bf16.xpose.msra.mxu0 0
    %1121 = vmatprep.subr.bf16.mxu0 0
    %1122 = vmatpush1.bf16.xpose.msra.mxu0 0
    %1123 = vmatprep.subr.bf16.mxu0 0
    %1124 = vmatpush1.bf16.xpose.msra.mxu0 0
    %1125 = vmatprep.subr.bf16.mxu0 0
    %1126 = vmatpush1.bf16.xpose.msra.mxu0 0
    %1127 = vmatprep.mubr.bf16.mxu0 0
    %1128 = vmatmul.mubr.bf16.gmra.mrb[0].mxu0 %v1090
    %v1129 = vpop.f32.mrb[0].mxu0
    %v1130 = vadd.f32 %v552, %v1129
    %v1131 = vpop.f32.mrb[0].mxu0
    %v1132 = vpop.f32.mrb[0].mxu0
    %v1133 = vadd.f32 %v553, %v1132
    %v1134 = vpop.f32.mrb[0].mxu0
    %1135 = vdwg.mxu0
    %v1136 = vadd.f32 %v1130, %v1012
    %v1137 = vadd.f32 %v1133, %v1013
    %v1138 = vsel %vm432, %v1136, -inf
    %1139 = vmax.xlane.f32.xlu0 %v1138
    %v1140 = vpop.xlane.xlu0 %1139
    %v1141 = vsel %vm432, %v1137, -inf
    %1142 = vmax.xlane.f32.xlu0 %v1141
    %v1143 = vpop.xlane.xlu0 %1142
    %v1144 = vsub.f32 %v1136, %v1140
    %v1145 = vsub.f32 %v1137, %v1143
    %v1146 = vmul.f32 %v1144, 1.442695
    %v1147 = vpow.pop %v1146
    %v1148 = vmul.f32 %v1145, 1.442695
    %v1149 = vpow.pop %v1148
    %v1150 = vsel %vm432, %v1147, 0.0
    %1151 = vadd.xlane.f32.xlu0 %v1150
    %v1152 = vpop.xlane.xlu0 %1151
    %v1153 = vsel %vm432, %v1149, 0.0
    %1154 = vadd.xlane.f32.xlu0 %v1153
    %v1155 = vpop.xlane.xlu0 %1154
    %v1156 = vrcp.pop %v1152
    %v1157 = vmul.f32 %v1147, %v1156
    %v1158 = vrcp.pop %v1155
    %v1159 = vmul.f32 %v1149, %v1158
    %v1160 = vpack.c.bf16 %v1159, %v1157
    %1162 = vrot.lane.b32.xlu0 %v429, 112
    %v1163 = vpop.permute.xlu0 %1162
    %v1166 = vsel %vm432, %v1160, 0
    %1168 = vmatprep.subr.bf16.mxu0 0
    %1169 = vmatpush1.bf16.msra.mxu0 %v1163
    %1170 = vmatprep.subr.bf16.mxu0 0
    %1171 = vmatpush1.bf16.msra.mxu0 0
    %1172 = vmatprep.subr.bf16.mxu0 0
    %1173 = vmatpush1.bf16.msra.mxu0 0
    %1174 = vmatprep.subr.bf16.mxu0 0
    %1175 = vmatpush1.bf16.msra.mxu0 0
    %1176 = vmatprep.subr.bf16.mxu0 0
    %1177 = vmatpush1.bf16.msra.mxu0 0
    %1178 = vmatprep.subr.bf16.mxu0 0
    %1179 = vmatpush1.bf16.msra.mxu0 0
    %1180 = vmatprep.subr.bf16.mxu0 0
    %1181 = vmatpush1.bf16.msra.mxu0 0
    %1182 = vmatprep.subr.bf16.mxu0 0
    %1183 = vmatpush1.bf16.msra.mxu0 0
    %1184 = vmatprep.subr.bf16.mxu0 0
    %1185 = vmatpush1.bf16.msra.mxu0 0
    %1186 = vmatprep.subr.bf16.mxu0 0
    %1187 = vmatpush1.bf16.msra.mxu0 0
    %1188 = vmatprep.subr.bf16.mxu0 0
    %1189 = vmatpush1.bf16.msra.mxu0 0
    %1190 = vmatprep.subr.bf16.mxu0 0
    %1191 = vmatpush1.bf16.msra.mxu0 0
    %1192 = vmatprep.subr.bf16.mxu0 0
    %1193 = vmatpush1.bf16.msra.mxu0 0
    %1194 = vmatprep.subr.bf16.mxu0 0
    %1195 = vmatpush1.bf16.msra.mxu0 0
    %1196 = vmatprep.subr.bf16.mxu0 0
    %1197 = vmatpush1.bf16.msra.mxu0 0
    %1198 = vmatprep.subr.bf16.mxu0 0
    %1199 = vmatpush1.bf16.msra.mxu0 0
    %1200 = vmatprep.mubr.bf16.mxu0 0
    %1201 = vmatmul.mubr.bf16.gmra.mrb[0].mxu0 %v1166
    %v1202 = vpop.f32.mrb[0].mxu0
    %v1203 = vadd.f32 0.0, %v1202
    %v1204 = vpop.f32.mrb[0].mxu0
    %v1205 = vpop.f32.mrb[0].mxu0
    %v1206 = vadd.f32 0.0, %v1205
    %v1207 = vpop.f32.mrb[0].mxu0
    %1208 = vdwg.mxu0
    %1209 = vrot.lane.b32.xlu0 %v247, 96
    %v1210 = vpop.permute.xlu0 %1209
    %1211 = vrot.lane.b32.xlu0 %v346, 96
    %v1212 = vpop.permute.xlu0 %1211
    %v1214 = vsel %vm432, %v1210, 0
    %v1217 = vsel %vm432, %v1212, 0
    %1219 = vmatprep.subr.bf16.mxu0 0
    %1220 = vmatpush1.bf16.xpose.msra.mxu0 %v1217
    %1221 = vmatprep.subr.bf16.mxu0 0
    %1222 = vmatpush1.bf16.xpose.msra.mxu0 0
    %1223 = vmatprep.subr.bf16.mxu0 0
    %1224 = vmatpush1.bf16.xpose.msra.mxu0 0
    %1225 = vmatprep.subr.bf16.mxu0 0
    %1226 = vmatpush1.bf16.xpose.msra.mxu0 0
    %1227 = vmatprep.subr.bf16.mxu0 0
    %1228 = vmatpush1.bf16.xpose.msra.mxu0 0
    %1229 = vmatprep.subr.bf16.mxu0 0
    %1230 = vmatpush1.bf16.xpose.msra.mxu0 0
    %1231 = vmatprep.subr.bf16.mxu0 0
    %1232 = vmatpush1.bf16.xpose.msra.mxu0 0
    %1233 = vmatprep.subr.bf16.mxu0 0
    %1234 = vmatpush1.bf16.xpose.msra.mxu0 0
    %1235 = vmatprep.subr.bf16.mxu0 0
    %1236 = vmatpush1.bf16.xpose.msra.mxu0 0
    %1237 = vmatprep.subr.bf16.mxu0 0
    %1238 = vmatpush1.bf16.xpose.msra.mxu0 0
    %1239 = vmatprep.subr.bf16.mxu0 0
    %1240 = vmatpush1.bf16.xpose.msra.mxu0 0
    %1241 = vmatprep.subr.bf16.mxu0 0
    %1242 = vmatpush1.bf16.xpose.msra.mxu0 0
    %1243 = vmatprep.subr.bf16.mxu0 0
    %1244 = vmatpush1.bf16.xpose.msra.mxu0 0
    %1245 = vmatprep.subr.bf16.mxu0 0
    %1246 = vmatpush1.bf16.xpose.msra.mxu0 0
    %1247 = vmatprep.subr.bf16.mxu0 0
    %1248 = vmatpush1.bf16.xpose.msra.mxu0 0
    %1249 = vmatprep.subr.bf16.mxu0 0
    %1250 = vmatpush1.bf16.xpose.msra.mxu0 0
    %1251 = vmatprep.mubr.bf16.mxu0 0
    %1252 = vmatmul.mubr.bf16.gmra.mrb[0].mxu0 %v1214
    %v1253 = vpop.f32.mrb[0].mxu0
    %v1254 = vadd.f32 %v681, %v1253
    %v1255 = vpop.f32.mrb[0].mxu0
    %v1256 = vpop.f32.mrb[0].mxu0
    %v1257 = vadd.f32 %v682, %v1256
    %v1258 = vpop.f32.mrb[0].mxu0
    %1259 = vdwg.mxu0
    %v1260 = vadd.f32 %v1254, %v1012
    %v1261 = vadd.f32 %v1257, %v1013
    %v1262 = vsel %vm432, %v1260, -inf
    %1263 = vmax.xlane.f32.xlu0 %v1262
    %v1264 = vpop.xlane.xlu0 %1263
    %v1265 = vsel %vm432, %v1261, -inf
    %1266 = vmax.xlane.f32.xlu0 %v1265
    %v1267 = vpop.xlane.xlu0 %1266
    %v1268 = vsub.f32 %v1260, %v1264
    %v1269 = vsub.f32 %v1261, %v1267
    %v1270 = vmul.f32 %v1268, 1.442695
    %v1271 = vpow.pop %v1270
    %v1272 = vmul.f32 %v1269, 1.442695
    %v1273 = vpow.pop %v1272
    %v1274 = vsel %vm432, %v1271, 0.0
    %1275 = vadd.xlane.f32.xlu0 %v1274
    %v1276 = vpop.xlane.xlu0 %1275
    %v1277 = vsel %vm432, %v1273, 0.0
    %1278 = vadd.xlane.f32.xlu0 %v1277
    %v1279 = vpop.xlane.xlu0 %1278
    %v1280 = vrcp.pop %v1276
    %v1281 = vmul.f32 %v1271, %v1280
    %v1282 = vrcp.pop %v1279
    %v1283 = vmul.f32 %v1273, %v1282
    %v1284 = vpack.c.bf16 %v1283, %v1281
    %1285 = vrot.lane.b32.xlu0 %v429, 96
    %v1286 = vpop.permute.xlu0 %1285
    %v1289 = vsel %vm432, %v1284, 0
    %1291 = vmatprep.subr.bf16.mxu0 0
    %1292 = vmatpush1.bf16.msra.mxu0 %v1286
    %1293 = vmatprep.subr.bf16.mxu0 0
    %1294 = vmatpush1.bf16.msra.mxu0 0
    %1295 = vmatprep.subr.bf16.mxu0 0
    %1296 = vmatpush1.bf16.msra.mxu0 0
    %1297 = vmatprep.subr.bf16.mxu0 0
    %1298 = vmatpush1.bf16.msra.mxu0 0
    %1299 = vmatprep.subr.bf16.mxu0 0
    %1300 = vmatpush1.bf16.msra.mxu0 0
    %1301 = vmatprep.subr.bf16.mxu0 0
    %1302 = vmatpush1.bf16.msra.mxu0 0
    %1303 = vmatprep.subr.bf16.mxu0 0
    %1304 = vmatpush1.bf16.msra.mxu0 0
    %1305 = vmatprep.subr.bf16.mxu0 0
    %1306 = vmatpush1.bf16.msra.mxu0 0
    %1307 = vmatprep.subr.bf16.mxu0 0
    %1308 = vmatpush1.bf16.msra.mxu0 0
    %1309 = vmatprep.subr.bf16.mxu0 0
    %1310 = vmatpush1.bf16.msra.mxu0 0
    %1311 = vmatprep.subr.bf16.mxu0 0
    %1312 = vmatpush1.bf16.msra.mxu0 0
    %1313 = vmatprep.subr.bf16.mxu0 0
    %1314 = vmatpush1.bf16.msra.mxu0 0
    %1315 = vmatprep.subr.bf16.mxu0 0
    %1316 = vmatpush1.bf16.msra.mxu0 0
    %1317 = vmatprep.subr.bf16.mxu0 0
    %1318 = vmatpush1.bf16.msra.mxu0 0
    %1319 = vmatprep.subr.bf16.mxu0 0
    %1320 = vmatpush1.bf16.msra.mxu0 0
    %1321 = vmatprep.subr.bf16.mxu0 0
    %1322 = vmatpush1.bf16.msra.mxu0 0
    %1323 = vmatprep.mubr.bf16.mxu0 0
    %1324 = vmatmul.mubr.bf16.gmra.mrb[0].mxu0 %v1289
    %v1325 = vpop.f32.mrb[0].mxu0
    %v1326 = vadd.f32 0.0, %v1325
    %v1327 = vpop.f32.mrb[0].mxu0
    %v1328 = vpop.f32.mrb[0].mxu0
    %v1329 = vadd.f32 0.0, %v1328
    %v1330 = vpop.f32.mrb[0].mxu0
    %1331 = vdwg.mxu0
    %1332 = vrot.lane.b32.xlu0 %v247, 80
    %v1333 = vpop.permute.xlu0 %1332
    %1334 = vrot.lane.b32.xlu0 %v346, 80
    %v1335 = vpop.permute.xlu0 %1334
    %v1337 = vsel %vm432, %v1333, 0
    %v1340 = vsel %vm432, %v1335, 0
    %1342 = vmatprep.subr.bf16.mxu0 0
    %1343 = vmatpush1.bf16.xpose.msra.mxu0 %v1340
    %1344 = vmatprep.subr.bf16.mxu0 0
    %1345 = vmatpush1.bf16.xpose.msra.mxu0 0
    %1346 = vmatprep.subr.bf16.mxu0 0
    %1347 = vmatpush1.bf16.xpose.msra.mxu0 0
    %1348 = vmatprep.subr.bf16.mxu0 0
    %1349 = vmatpush1.bf16.xpose.msra.mxu0 0
    %1350 = vmatprep.subr.bf16.mxu0 0
    %1351 = vmatpush1.bf16.xpose.msra.mxu0 0
    %1352 = vmatprep.subr.bf16.mxu0 0
    %1353 = vmatpush1.bf16.xpose.msra.mxu0 0
    %1354 = vmatprep.subr.bf16.mxu0 0
    %1355 = vmatpush1.bf16.xpose.msra.mxu0 0
    %1356 = vmatprep.subr.bf16.mxu0 0
    %1357 = vmatpush1.bf16.xpose.msra.mxu0 0
    %1358 = vmatprep.subr.bf16.mxu0 0
    %1359 = vmatpush1.bf16.xpose.msra.mxu0 0
    %1360 = vmatprep.subr.bf16.mxu0 0
    %1361 = vmatpush1.bf16.xpose.msra.mxu0 0
    %1362 = vmatprep.subr.bf16.mxu0 0
    %1363 = vmatpush1.bf16.xpose.msra.mxu0 0
    %1364 = vmatprep.subr.bf16.mxu0 0
    %1365 = vmatpush1.bf16.xpose.msra.mxu0 0
    %1366 = vmatprep.subr.bf16.mxu0 0
    %1367 = vmatpush1.bf16.xpose.msra.mxu0 0
    %1368 = vmatprep.subr.bf16.mxu0 0
    %1369 = vmatpush1.bf16.xpose.msra.mxu0 0
    %1370 = vmatprep.subr.bf16.mxu0 0
    %1371 = vmatpush1.bf16.xpose.msra.mxu0 0
    %1372 = vmatprep.subr.bf16.mxu0 0
    %1373 = vmatpush1.bf16.xpose.msra.mxu0 0
    %1374 = vmatprep.mubr.bf16.mxu0 0
    %1375 = vmatmul.mubr.bf16.gmra.mrb[0].mxu0 %v1337
    %v1376 = vpop.f32.mrb[0].mxu0
    %v1377 = vadd.f32 %v807, %v1376
    %v1378 = vpop.f32.mrb[0].mxu0
    %v1379 = vpop.f32.mrb[0].mxu0
    %v1380 = vadd.f32 %v808, %v1379
    %v1381 = vpop.f32.mrb[0].mxu0
    %1382 = vdwg.mxu0
    %v1383 = vadd.f32 %v1377, %v1012
    %v1384 = vadd.f32 %v1380, %v1013
    %v1385 = vsel %vm432, %v1383, -inf
    %1386 = vmax.xlane.f32.xlu0 %v1385
    %v1387 = vpop.xlane.xlu0 %1386
    %v1388 = vsel %vm432, %v1384, -inf
    %1389 = vmax.xlane.f32.xlu0 %v1388
    %v1390 = vpop.xlane.xlu0 %1389
    %v1391 = vsub.f32 %v1383, %v1387
    %v1392 = vsub.f32 %v1384, %v1390
    %v1393 = vmul.f32 %v1391, 1.442695
    %v1394 = vpow.pop %v1393
    %v1395 = vmul.f32 %v1392, 1.442695
    %v1396 = vpow.pop %v1395
    %v1397 = vsel %vm432, %v1394, 0.0
    %1398 = vadd.xlane.f32.xlu0 %v1397
    %v1399 = vpop.xlane.xlu0 %1398
    %v1400 = vsel %vm432, %v1396, 0.0
    %1401 = vadd.xlane.f32.xlu0 %v1400
    %v1402 = vpop.xlane.xlu0 %1401
    %v1403 = vrcp.pop %v1399
    %v1404 = vmul.f32 %v1394, %v1403
    %v1405 = vrcp.pop %v1402
    %v1406 = vmul.f32 %v1396, %v1405
    %v1407 = vpack.c.bf16 %v1406, %v1404
    %1408 = vrot.lane.b32.xlu0 %v429, 80
    %v1409 = vpop.permute.xlu0 %1408
    %v1412 = vsel %vm432, %v1407, 0
    %1414 = vmatprep.subr.bf16.mxu0 0
    %1415 = vmatpush1.bf16.msra.mxu0 %v1409
    %1416 = vmatprep.subr.bf16.mxu0 0
    %1417 = vmatpush1.bf16.msra.mxu0 0
    %1418 = vmatprep.subr.bf16.mxu0 0
    %1419 = vmatpush1.bf16.msra.mxu0 0
    %1420 = vmatprep.subr.bf16.mxu0 0
    %1421 = vmatpush1.bf16.msra.mxu0 0
    %1422 = vmatprep.subr.bf16.mxu0 0
    %1423 = vmatpush1.bf16.msra.mxu0 0
    %1424 = vmatprep.subr.bf16.mxu0 0
    %1425 = vmatpush1.bf16.msra.mxu0 0
    %1426 = vmatprep.subr.bf16.mxu0 0
    %1427 = vmatpush1.bf16.msra.mxu0 0
    %1428 = vmatprep.subr.bf16.mxu0 0
    %1429 = vmatpush1.bf16.msra.mxu0 0
    %1430 = vmatprep.subr.bf16.mxu0 0
    %1431 = vmatpush1.bf16.msra.mxu0 0
    %1432 = vmatprep.subr.bf16.mxu0 0
    %1433 = vmatpush1.bf16.msra.mxu0 0
    %1434 = vmatprep.subr.bf16.mxu0 0
    %1435 = vmatpush1.bf16.msra.mxu0 0
    %1436 = vmatprep.subr.bf16.mxu0 0
    %1437 = vmatpush1.bf16.msra.mxu0 0
    %1438 = vmatprep.subr.bf16.mxu0 0
    %1439 = vmatpush1.bf16.msra.mxu0 0
    %1440 = vmatprep.subr.bf16.mxu0 0
    %1441 = vmatpush1.bf16.msra.mxu0 0
    %1442 = vmatprep.subr.bf16.mxu0 0
    %1443 = vmatpush1.bf16.msra.mxu0 0
    %1444 = vmatprep.subr.bf16.mxu0 0
    %1445 = vmatpush1.bf16.msra.mxu0 0
    %1446 = vmatprep.mubr.bf16.mxu0 0
    %1447 = vmatmul.mubr.bf16.gmra.mrb[0].mxu0 %v1412
    %v1448 = vpop.f32.mrb[0].mxu0
    %v1449 = vadd.f32 0.0, %v1448
    %v1450 = vpop.f32.mrb[0].mxu0
    %v1451 = vpop.f32.mrb[0].mxu0
    %v1452 = vadd.f32 0.0, %v1451
    %v1453 = vpop.f32.mrb[0].mxu0
    %1454 = vdwg.mxu0
    %1457 = vrot.lane.b32.xlu0 %v1203, 16
    %v1458 = vpop.permute.xlu0 %1457
    %1459 = vrot.lane.b32.xlu0 %v1206, 16
    %v1460 = vpop.permute.xlu0 %1459
    %1465 = vrot.lane.b32.xlu0 %v1326, 32
    %v1466 = vpop.permute.xlu0 %1465
    %1467 = vrot.lane.b32.xlu0 %v1329, 32
    %v1468 = vpop.permute.xlu0 %1467
    %1473 = vrot.lane.b32.xlu0 %v1449, 48
    %v1474 = vpop.permute.xlu0 %1473
    %1475 = vrot.lane.b32.xlu0 %v1452, 48
    %v1476 = vpop.permute.xlu0 %1475
    %v1479 = vsel %vm432, %v1077, %v1458
    %v1480 = vsel %vm432, %v1080, %v1460
    %v1481 = vsel %vm958, %v1479, %v1466
    %v1482 = vsel %vm958, %v1480, %v1468
    %v1483 = vsel %vm961, %v1481, %v1474
    %v1484 = vsel %vm961, %v1482, %v1476
    %v1485 = vpack.c.bf16 %v963, %v962
    %v1486 = vpack.c.bf16 %v1484, %v1483
    %v1487 = vld [vmem:[#allocation11] sm:$0xf]
    %v1488 = vld [vmem:[#allocation11 + $0x4] sm:$0xf]
    %v1489 = vld [vmem:[#allocation11 + $0x8] sm:$0xf]
    %v1490 = vld [vmem:[#allocation11 + $0xc] sm:$0xf]
    %v1491 = vld [vmem:[#allocation11 + $0x10] sm:$0xf]
    %v1492 = vld [vmem:[#allocation11 + $0x14] sm:$0xf]
    %v1493 = vld [vmem:[#allocation11 + $0x18] sm:$0xf]
    %v1494 = vld [vmem:[#allocation11 + $0x1c] sm:$0xf]
    %v1503 = vunpack.c.l.b16 %v1487
    %v1504 = vunpack.c.l.b16 %v1488
    %v1505 = vunpack.c.l.b16 %v1489
    %v1506 = vunpack.c.l.b16 %v1490
    %v1507 = vunpack.c.l.b16 %v1491
    %v1508 = vunpack.c.l.b16 %v1492
    %v1509 = vunpack.c.l.b16 %v1493
    %v1510 = vunpack.c.l.b16 %v1494
    %v1511 = vpack.c.b16 %v1504, %v1503
    %v1512 = vpack.c.b16 %v1506, %v1505
    %v1513 = vpack.c.b16 %v1508, %v1507
    %v1514 = vpack.c.b16 %v1510, %v1509
    %v1520 = vsel %vm190, %v1485, 0
    %v1523 = vsel %vm190, %v1486, 0
    %1525 = vmatprep.subr.bf16.mxu0 0
    %1526 = vmatpush1.bf16.msra.mxu0 %v1511
    %1527 = vmatprep.subr.bf16.mxu0 0
    %1528 = vmatpush1.bf16.msra.mxu0 %v1512
    %1529 = vmatprep.subr.bf16.mxu0 0
    %1530 = vmatpush1.bf16.msra.mxu0 %v1513
    %1531 = vmatprep.subr.bf16.mxu0 0
    %1532 = vmatpush1.bf16.msra.mxu0 %v1514
    %1533 = vmatprep.subr.bf16.mxu0 0
    %1534 = vmatpush1.bf16.msra.mxu0 0
    %1535 = vmatprep.subr.bf16.mxu0 0
    %1536 = vmatpush1.bf16.msra.mxu0 0
    %1537 = vmatprep.subr.bf16.mxu0 0
    %1538 = vmatpush1.bf16.msra.mxu0 0
    %1539 = vmatprep.subr.bf16.mxu0 0
    %1540 = vmatpush1.bf16.msra.mxu0 0
    %1541 = vmatprep.subr.bf16.mxu0 0
    %1542 = vmatpush1.bf16.msra.mxu0 0
    %1543 = vmatprep.subr.bf16.mxu0 0
    %1544 = vmatpush1.bf16.msra.mxu0 0
    %1545 = vmatprep.subr.bf16.mxu0 0
    %1546 = vmatpush1.bf16.msra.mxu0 0
    %1547 = vmatprep.subr.bf16.mxu0 0
    %1548 = vmatpush1.bf16.msra.mxu0 0
    %1549 = vmatprep.subr.bf16.mxu0 0
    %1550 = vmatpush1.bf16.msra.mxu0 0
    %1551 = vmatprep.subr.bf16.mxu0 0
    %1552 = vmatpush1.bf16.msra.mxu0 0
    %1553 = vmatprep.subr.bf16.mxu0 0
    %1554 = vmatpush1.bf16.msra.mxu0 0
    %1555 = vmatprep.subr.bf16.mxu0 0
    %1556 = vmatpush1.bf16.msra.mxu0 0
    %1557 = vmatprep.mubr.bf16.mxu0 0
    %1558 = vmatmul.mubr.bf16.gmra.mrb[0].mxu0 %v1520
    %v1559 = vpop.f32.mrb[0].mxu0
    %v1560 = vadd.f32 0.0, %v1559
    %v1561 = vpop.f32.mrb[0].mxu0
    %v1562 = vpop.f32.mrb[0].mxu0
    %v1563 = vadd.f32 0.0, %v1562
    %v1564 = vpop.f32.mrb[0].mxu0
    %1565 = vmatprep.mubr.bf16.mxu0 0
    %1566 = vmatmul.mubr.bf16.gmra.mrb[0].mxu0 %v1523
    %v1567 = vpop.f32.mrb[0].mxu0
    %v1568 = vadd.f32 0.0, %v1567
    %v1569 = vpop.f32.mrb[0].mxu0
    %v1570 = vpop.f32.mrb[0].mxu0
    %v1571 = vadd.f32 0.0, %v1570
    %v1572 = vpop.f32.mrb[0].mxu0
    %1573 = vdwg.mxu0
    %1574 = vst.msk [vmem:[#allocation16] sm:$0xff] %vm190, %v1560
    %1575 = vst.msk [vmem:[#allocation16 + $0x8] sm:$0xff] %vm190, %v1563
    %1576 = vst.msk [vmem:[#allocation16 + $0x10] sm:$0xff] %vm190, %v1568
    %1577 = vst.msk [vmem:[#allocation16 + $0x18] sm:$0xff] %vm190, %v1571
    // Predicated region
    $region66: #{tpu_custom_call.1} parent=1 // pred_check
      _
    $region67: #{tpu_custom_call.1} parent=1 // pred_check_branch
      %1579 = sbr.rel (0) target = $region69
    $region68: #{tpu_custom_call.1} parent=1 // pred_region
      %s1581 = ssub.s32 512, 512
      %1582 = vsyncadd [#allocation4], %s1581
      %s1583 = sshll.u32 [#allocation16], 4
      %s1584 = int_to_ptr.vmem [resolvable:$true] %s1583
      %1589 = dma.vmem_to_hbm [thread:$0]  %s1584, 512, %s8, [#allocation4], 128, 128, 8
    $region69: #{tpu_custom_call.1} parent=1 // pred_fallthru
      _
    // Predicated region
    $region70: #{tpu_custom_call.1} parent=1 // pred_check
      _
    $region71: #{tpu_custom_call.1} parent=1 // pred_check_branch
      %1591 = sbr.rel (0) target = $region73
    $region72: #{tpu_custom_call.1} parent=1 // pred_region
      %1592 = dma.done [#allocation4], 512
    $region73: #{tpu_custom_call.1} parent=1 // pred_fallthru
      _
    %1593 = vsyncpa [#allocation3], 1
    %1594 = vsyncpa [#allocation6], 1
    %1595 = vsyncpa [#allocation9], 1
    %1596 = vsyncpa [#allocation12], 1
    %1597 = vsyncpa [#allocation15], 1
    %1598 = vsyncpa [#allocation4], 1

</llo_original>
